<compile_context>
chip_gen: v7x
topology: tpu7x:2x2x1
jax: 0.10.0
libtpu: 0.0.40
codegen_flags: <defaults>
</compile_context>

<pallas_src>
import functools
import math

import jax
import jax.numpy as jnp
from jax import lax
from jax.experimental import pallas as pl
from jax.experimental.pallas import tpu as pltpu


def transformer_block_kernel(
        x_ref,
        wq_ref, bq_ref, wkv_ref, bkv_ref,
        wo_ref, bo_ref,
        g1_ref, be1_ref, g2_ref, be2_ref,
        w1_ref, bb1_ref, w2_ref, bb2_ref,
        o_ref,
        k_sc, v_sc, q_sc,
        *, num_heads, block_kv, ffn_chunk):
    """Grid point (b, qi): one (block_q, H) query tile of batch element b.

    x_ref : (S, H) f32  -- full sequence of batch element b
    o_ref : (block_q, H) f32
    """
    f32 = jnp.float32
    bf16 = jnp.bfloat16
    eps = 1e-5

    qi = pl.program_id(1)
    S, H = x_ref.shape
    block_q = o_ref.shape[0]
    d = H // num_heads

    def layer_norm(t, g_ref, b_ref):
        mu = jnp.mean(t, axis=-1, keepdims=True)
        var = jnp.mean((t - mu) ** 2, axis=-1, keepdims=True)
        return (t - mu) * lax.rsqrt(var + eps) * g_ref[...] + b_ref[...]

    # ---- K/V projection of the full sequence: once per batch element. --------
    # Single fused (S, H) x (H, 2H) matmul, then head-major scratch writes
    # (lane slices) instead of per-head N=d matmuls.
    @pl.when(qi == 0)
    def _():
        xn = layer_norm(x_ref[...], g1_ref, be1_ref).astype(bf16)          # (S, H)
        kv = (jnp.dot(xn, wkv_ref[...], preferred_element_type=f32)
              + bkv_ref[...]).astype(bf16)                                 # (S, 2H)
        for h in range(num_heads):                 # static; once per batch elem
            k_sc[h] = kv[:, h * d:(h + 1) * d]
            v_sc[h] = kv[:, H + h * d:H + (h + 1) * d]

    # ---- Q projection for this query tile (1/sqrt(d) folded into wq/bq). -----
    row = pl.multiple_of(qi * block_q, block_q)
    x_q = x_ref[pl.ds(row, block_q), :]                                    # (BQ, H)
    xn_q = layer_norm(x_q, g1_ref, be1_ref).astype(bf16)
    q_full = (jnp.dot(xn_q, wq_ref[...], preferred_element_type=f32)
              + bq_ref[...]).astype(bf16)                                  # (BQ, H)
    for h in range(num_heads):
        q_sc[h] = q_full[:, h * d:(h + 1) * d]
    q = q_sc[...]                                                          # (nh,BQ,d)

    # ---- Attention: K/V-blocked online softmax, heads batched per einsum. ----
    num_kv = S // block_kv
    m = l = acc = None
    for kb in range(num_kv):                       # static unroll
        ks = k_sc[:, kb * block_kv:(kb + 1) * block_kv, :]                 # (nh,BK,d)
        vs = v_sc[:, kb * block_kv:(kb + 1) * block_kv, :]
        s = jnp.einsum("hqd,hkd->hqk", q, ks,
                       preferred_element_type=f32)                         # (nh,BQ,BK)
        m_blk = jnp.max(s, axis=-1, keepdims=True)
        if kb == 0:
            m = m_blk
            p = jnp.exp(s - m)
            l = jnp.sum(p, axis=-1, keepdims=True)
            acc = jnp.einsum("hqk,hkd->hqd", p.astype(bf16), vs,
                             preferred_element_type=f32)                   # (nh,BQ,d)
        else:
            m_new = jnp.maximum(m, m_blk)
            alpha = jnp.exp(m - m_new)
            p = jnp.exp(s - m_new)
            l = alpha * l + jnp.sum(p, axis=-1, keepdims=True)
            acc = alpha * acc + jnp.einsum("hqk,hkd->hqd", p.astype(bf16), vs,
                                           preferred_element_type=f32)
            m = m_new
    # Normalize AFTER the context matmul (saves an (nh, BQ, S) pass).
    ctx = (acc * pl.reciprocal(l, approx=True)).astype(bf16)               # (nh,BQ,d)

    # ---- Output projection: head-major wo (nh, d, H); per-head accumulate. ---
    attn = jnp.dot(ctx[0], wo_ref[0], preferred_element_type=f32)
    for h in range(1, num_heads):
        attn = attn + jnp.dot(ctx[h], wo_ref[h], preferred_element_type=f32)
    attn = attn + bo_ref[...]                                              # (BQ, H)

    res1 = x_q + attn                                                      # residual 1

    # ---- Feed-forward, chunked over the 4H dim (bounds the live f32 hidden). -
    xn2 = layer_norm(res1, g2_ref, be2_ref).astype(bf16)
    ffn_dim = w1_ref.shape[1]
    ff = None
    for c in range(ffn_dim // ffn_chunk):          # static unroll
        c0 = c * ffn_chunk
        hdn = jnp.maximum(
            jnp.dot(xn2, w1_ref[:, c0:c0 + ffn_chunk],
                    preferred_element_type=f32) + bb1_ref[:, c0:c0 + ffn_chunk],
            0.0).astype(bf16)                                              # (BQ,chunk)
        part = jnp.dot(hdn, w2_ref[c0:c0 + ffn_chunk, :],
                       preferred_element_type=f32)
        ff = part if ff is None else ff + part
    ff = ff + bb2_ref[...]

    o_ref[...] = (res1 + ff).astype(o_ref.dtype)                           # residual 2


def _pick_tile(n, target):
    """Largest tile <= target that divides n and is a multiple of 8 (or n)."""
    if n <= target:
        return n
    t = (target // 8) * 8
    while t >= 8:
        if n % t == 0:
            return t
        t -= 8
    return n


def _tpu_vmem_capacity_bytes(default=64 * 1024 * 1024):
    """Per-TensorCore VMEM capacity; falls back to the v7x (smallest) value."""
    try:
        return int(pltpu.get_tpu_info().vmem_capacity_bytes)
    except Exception:
        return default


def transformer_block(x_sbh, prep, *, num_heads, block_q=None, block_kv=None,
                      ffn_chunk=None):
    """x_sbh: (S, B, H) f32 (PyTorch nn.MultiheadAttention default layout).
    `prep` is the output of prepare_params()."""
    S, B, H = x_sbh.shape
    assert H % num_heads == 0
    d = H // num_heads

    vmem_cap = _tpu_vmem_capacity_bytes()
    # Leave headroom below physical VMEM (v7x: 64 MiB/TC; v5e/v6e: 128 MiB).
    vmem_limit = max(32 * 1024 * 1024,
                     min(vmem_cap - 8 * 1024 * 1024, 100 * 1024 * 1024))

    if block_q is None:
        # 256 fills the 256-wide MXU on v6e; stay at 128 when VMEM is tight.
        block_q = _pick_tile(S, 256 if vmem_cap >= 96 * 1024 * 1024 else 128)
    assert S % block_q == 0 and (block_q % 8 == 0 or block_q == S)
    if block_kv is None:
        block_kv = _pick_tile(S, 512)
    assert S % block_kv == 0
    if ffn_chunk is None:
        ffn_chunk = _pick_tile(4 * H, 512)
    assert (4 * H) % ffn_chunk == 0
    num_q = S // block_q

    kernel = functools.partial(transformer_block_kernel, num_heads=num_heads,
                               block_kv=block_kv, ffn_chunk=ffn_chunk)

    def _rep_spec(arr):                    # full-array block, constant index
        zeros = (0,) * arr.ndim
        return pl.BlockSpec(arr.shape, lambda b, qi, zeros=zeros: zeros)

    # TODO(synk): single-buffer the resident weights (pipeline_mode=pl.Buffered(1))
    # once verified; default double-buffering makes the weight footprint up to
    # 48*H^2 bytes (24*H^2 single-buffered bf16), which matters on v7x at large H.
    weight_specs = [_rep_spec(p) for p in prep]
    scratch = [
        pltpu.VMEM((num_heads, S, d), jnp.bfloat16),        # K (head-major)
        pltpu.VMEM((num_heads, S, d), jnp.bfloat16),        # V (head-major)
        pltpu.VMEM((num_heads, block_q, d), jnp.bfloat16),  # Q (head-major)
    ]
    cparams = pltpu.CompilerParams(
        dimension_semantics=("parallel", "arbitrary"),
        vmem_limit_bytes=vmem_limit)

    if H % 128 == 0 or B == 1:
        # Fast path: read/write the (S, B, H) HBM layout directly through a free
        # (S, B*H) view -> no wrapper HBM transposes.
        x2d = x_sbh.reshape(S, B * H)
        out2d = pl.pallas_call(
            kernel,
            out_shape=jax.ShapeDtypeStruct((S, B * H), jnp.float32),
            grid_spec=pltpu.PrefetchScalarGridSpec(
                num_scalar_prefetch=0,
                grid=(B, num_q),          # qi innermost: K/V scratch reused per b
                in_specs=[pl.BlockSpec((S, H), lambda b, qi: (0, b))]
                         + weight_specs,
                out_specs=pl.BlockSpec((block_q, H), lambda b, qi: (qi, b)),
                scratch_shapes=scratch),
            compiler_params=cparams,
        )(x2d, *prep)
        return out2d.reshape(S, B, H)

    # Fallback (lane-unaligned H with B > 1): a size-1 second-minor block over B
    # would violate the (8,128) rule, so transpose to (B, S, H) in the wrapper.
    x = jnp.transpose(x_sbh, (1, 0, 2))
    out = pl.pallas_call(
        kernel,
        out_shape=jax.ShapeDtypeStruct((B, S, H), jnp.float32),
        grid_spec=pltpu.PrefetchScalarGridSpec(
            num_scalar_prefetch=0,
            grid=(B, num_q),
            in_specs=[pl.BlockSpec((None, S, H), lambda b, qi: (b, 0, 0))]
                     + weight_specs,
            out_specs=pl.BlockSpec((None, block_q, H), lambda b, qi: (b, qi, 0)),
            scratch_shapes=scratch),
        compiler_params=cparams,
    )(x, *prep)
    return jnp.transpose(out, (1, 0, 2))


def init_params(key, hidden_size):
    """Synthetic parameters matching nn.MultiheadAttention / LayerNorm / Linear.
    Weights are stored pre-transposed for x @ W."""
    H = hidden_size
    ks = jax.random.split(key, 8)
    scale = 0.05
    w_in = scale * jax.random.normal(ks[0], (H, 3 * H), jnp.float32)   # in_proj.T
    b_in = scale * jax.random.normal(ks[1], (1, 3 * H), jnp.float32)
    w_out = scale * jax.random.normal(ks[2], (H, H), jnp.float32)      # out_proj.T
    b_out = scale * jax.random.normal(ks[3], (1, H), jnp.float32)
    g1 = jnp.ones((1, H), jnp.float32)
    be1 = jnp.zeros((1, H), jnp.float32)
    g2 = jnp.ones((1, H), jnp.float32)
    be2 = jnp.zeros((1, H), jnp.float32)
    w1 = scale * jax.random.normal(ks[4], (H, 4 * H), jnp.float32)     # ff1.T
    bb1 = scale * jax.random.normal(ks[5], (1, 4 * H), jnp.float32)
    w2 = scale * jax.random.normal(ks[6], (4 * H, H), jnp.float32)     # ff2.T
    bb2 = scale * jax.random.normal(ks[7], (1, H), jnp.float32)
    return (w_in, b_in, w_out, b_out, g1, be1, g2, be2, w1, bb1, w2, bb2)


def prepare_params(params, num_heads, weight_dtype=jnp.bfloat16):
    """One-time parameter transform (model-init time in production): fuse the
    K/V projection weights, fold 1/sqrt(d) into the Q projection, store the
    output projection head-major, cast large matrices to `weight_dtype`."""
    (w_in, b_in, w_out, b_out, g1, be1, g2, be2, w1, bb1, w2, bb2) = params
    H = w_out.shape[0]
    d = H // num_heads
    scale = 1.0 / math.sqrt(d)

    wq = (w_in[:, :H] * scale).astype(weight_dtype)                   # (H, H)
    bq = b_in[:, :H] * scale                                          # (1, H) f32
    wkv = w_in[:, H:].astype(weight_dtype)                            # (H, 2H)
    bkv = b_in[:, H:]                                                 # (1, 2H) f32
    wo_hm = w_out.reshape(num_heads, d, H).astype(weight_dtype)       # (nh, d, H)
    return (wq, bq, wkv, bkv, wo_hm, b_out,
            g1, be1, g2, be2,
            w1.astype(weight_dtype), bb1, w2.astype(weight_dtype), bb2)


def reference_transformer_block(x_sbh, prep, *, num_heads,
                                matmul_dtype=jnp.float32):
    """Pure-JAX reference of the PyTorch eval forward (mask=None).  With
    matmul_dtype=bf16 it mirrors the kernel's bf16-at-MXU-boundary numerics
    (f32 accumulation, f32 LayerNorm/softmax)."""
    (wq, bq, wkv, bkv, wo_hm, bo, g1, be1, g2, be2, w1, bb1, w2, bb2) = prep
    S, B, H = x_sbh.shape
    d = H // num_heads
    eps = 1e-5
    f32 = jnp.float32

    def ln(t, g, b):
        mu = jnp.mean(t, axis=-1, keepdims=True)
        var = jnp.mean((t - mu) ** 2, axis=-1, keepdims=True)
        return (t - mu) * lax.rsqrt(var + eps) * g + b

    def cast(t):
        return t.astype(matmul_dtype)

    def split_heads(t):          # (B, S, H) -> (B, nh, S, d)
        return jnp.transpose(t.reshape(B, S, num_heads, d), (0, 2, 1, 3))

    x = jnp.transpose(x_sbh, (1, 0, 2)).astype(f32)                       # (B,S,H)
    xn = cast(ln(x, g1, be1))
    qf = cast(jnp.einsum("bsh,hk->bsk", xn, wq,
                         preferred_element_type=f32) + bq)
    kvf = cast(jnp.einsum("bsh,hk->bsk", xn, wkv,
                          preferred_element_type=f32) + bkv)
    q = split_heads(qf)
    k = split_heads(kvf[..., :H])
    v = split_heads(kvf[..., H:])
    s = jnp.einsum("bnqd,bnkd->bnqk", q, k, preferred_element_type=f32)
    s = s - jnp.max(s, axis=-1, keepdims=True)
    p = jnp.exp(s)
    ctx = jnp.einsum("bnqk,bnkd->bnqd", cast(p), v, preferred_element_type=f32)
    ctx = ctx / jnp.sum(p, axis=-1, keepdims=True)
    attn = jnp.einsum("bnqd,ndh->bqh", cast(ctx), wo_hm,
                      preferred_element_type=f32) + bo
    x = x + attn
    xn2 = cast(ln(x, g2, be2))
    h1 = jnp.maximum(jnp.einsum("bsh,hf->bsf", xn2, w1,
                                preferred_element_type=f32) + bb1, 0.0)
    ff = jnp.einsum("bsf,fh->bsh", cast(h1), w2,
                    preferred_element_type=f32) + bb2
    x = x + ff
    return jnp.transpose(x, (1, 0, 2))


if __name__ == "__main__":
    # Main demo: H is a lane multiple -> exercises the direct (no-transpose) path.
    S, B, H, num_heads = 16, 2, 128, 4        # d = 32; two query tiles of 8

    key = jax.random.PRNGKey(0)
    kx, kp = jax.random.split(key)
    x = jax.random.normal(kx, (S, B, H), jnp.float32)      # (seq, batch, hidden)
    params = init_params(kp, H)

    prep_bf16 = prepare_params(params, num_heads, weight_dtype=jnp.bfloat16)
    out = transformer_block(x, prep_bf16, num_heads=num_heads, block_q=8)
    out = jax.block_until_ready(out)
    assert out.shape == (S, B, H)

    # Tight check: reference mirroring the kernel's bf16-boundary numerics.
    ref_bf16 = reference_transformer_block(
        x, prep_bf16, num_heads=num_heads, matmul_dtype=jnp.bfloat16)
    assert jnp.allclose(out, ref_bf16, atol=5e-3, rtol=5e-3), (
        "mismatch vs bf16-mirrored reference")

    # Looser sanity check: full-f32 PyTorch-faithful math.
    prep_f32 = prepare_params(params, num_heads, weight_dtype=jnp.float32)
    ref_f32 = reference_transformer_block(
        x, prep_f32, num_heads=num_heads, matmul_dtype=jnp.float32)
    assert jnp.allclose(out, ref_f32, atol=3e-2, rtol=3e-2), (
        "mismatch vs f32 reference")

    # Fallback path (lane-unaligned H, B > 1): same kernel body, transposed specs.
    S2, B2, H2, nh2 = 16, 2, 32, 4
    x2 = jax.random.normal(jax.random.PRNGKey(1), (S2, B2, H2), jnp.float32)
    prep2 = prepare_params(init_params(jax.random.PRNGKey(2), H2), nh2)
    out2 = jax.block_until_ready(
        transformer_block(x2, prep2, num_heads=nh2, block_q=8))
    ref2 = reference_transformer_block(
        x2, prep2, num_heads=nh2, matmul_dtype=jnp.bfloat16)
    assert jnp.allclose(out2, ref2, atol=5e-3, rtol=5e-3), (
        "mismatch vs bf16-mirrored reference (fallback layout path)")

    print("KERNEL_OK")
</pallas_src>

<mosaic_0001>
module attributes {stable_mosaic.version = 11 : i64} {
  func.func @transformer_block_kernel(%arg0: i32, %arg1: i32, %arg2: memref<16x128xf32, #tpu.memory_space<vmem>>, %arg3: memref<128x128xbf16, #tpu.memory_space<vmem>>, %arg4: memref<1x128xf32, #tpu.memory_space<vmem>>, %arg5: memref<128x256xbf16, #tpu.memory_space<vmem>>, %arg6: memref<1x256xf32, #tpu.memory_space<vmem>>, %arg7: memref<4x32x128xbf16, #tpu.memory_space<vmem>>, %arg8: memref<1x128xf32, #tpu.memory_space<vmem>>, %arg9: memref<1x128xf32, #tpu.memory_space<vmem>>, %arg10: memref<1x128xf32, #tpu.memory_space<vmem>>, %arg11: memref<1x128xf32, #tpu.memory_space<vmem>>, %arg12: memref<1x128xf32, #tpu.memory_space<vmem>>, %arg13: memref<128x512xbf16, #tpu.memory_space<vmem>>, %arg14: memref<1x512xf32, #tpu.memory_space<vmem>>, %arg15: memref<512x128xbf16, #tpu.memory_space<vmem>>, %arg16: memref<1x128xf32, #tpu.memory_space<vmem>>, %arg17: memref<8x128xf32, #tpu.memory_space<vmem>>, %arg18: memref<4x16x32xbf16, #tpu.memory_space<vmem>>, %arg19: memref<4x16x32xbf16, #tpu.memory_space<vmem>>, %arg20: memref<4x8x32xbf16, #tpu.memory_space<vmem>>) attributes {dimension_semantics = [#tpu.dimension_semantics<parallel>, #tpu.dimension_semantics<arbitrary>], iteration_bounds = array<i64: 2, 2>, scalar_prefetch = 0 : i64, scratch_operands = 3 : i64, tpu.core_type = #tpu.core_type<tc>, window_params = [{transform_indices = @transform_0, window_bounds = array<i64: 16, 128>}, {pipeline_mode = #tpu.pipeline_mode<synchronous>, transform_indices = @transform_1, window_bounds = array<i64: 128, 128>}, {pipeline_mode = #tpu.pipeline_mode<synchronous>, transform_indices = @transform_2, window_bounds = array<i64: 1, 128>}, {pipeline_mode = #tpu.pipeline_mode<synchronous>, transform_indices = @transform_3, window_bounds = array<i64: 128, 256>}, {pipeline_mode = #tpu.pipeline_mode<synchronous>, transform_indices = @transform_4, window_bounds = array<i64: 1, 256>}, {pipeline_mode = #tpu.pipeline_mode<synchronous>, transform_indices = @transform_5, window_bounds = array<i64: 4, 32, 128>}, {pipeline_mode = #tpu.pipeline_mode<synchronous>, transform_indices = @transform_6, window_bounds = array<i64: 1, 128>}, {pipeline_mode = #tpu.pipeline_mode<synchronous>, transform_indices = @transform_7, window_bounds = array<i64: 1, 128>}, {pipeline_mode = #tpu.pipeline_mode<synchronous>, transform_indices = @transform_8, window_bounds = array<i64: 1, 128>}, {pipeline_mode = #tpu.pipeline_mode<synchronous>, transform_indices = @transform_9, window_bounds = array<i64: 1, 128>}, {pipeline_mode = #tpu.pipeline_mode<synchronous>, transform_indices = @transform_10, window_bounds = array<i64: 1, 128>}, {pipeline_mode = #tpu.pipeline_mode<synchronous>, transform_indices = @transform_11, window_bounds = array<i64: 128, 512>}, {pipeline_mode = #tpu.pipeline_mode<synchronous>, transform_indices = @transform_12, window_bounds = array<i64: 1, 512>}, {pipeline_mode = #tpu.pipeline_mode<synchronous>, transform_indices = @transform_13, window_bounds = array<i64: 512, 128>}, {pipeline_mode = #tpu.pipeline_mode<synchronous>, transform_indices = @transform_14, window_bounds = array<i64: 1, 128>}, {transform_indices = @transform_15, window_bounds = array<i64: 8, 128>}]} {
    %c0_i32 = arith.constant 0 : i32
    %0 = arith.cmpi eq, %arg1, %c0_i32 : i32
    %1 = arith.extui %0 : i1 to i32
    %c0_i32_0 = arith.constant 0 : i32
    %2 = arith.cmpi ne, %1, %c0_i32_0 : i32
    scf.if %2 {
      %c0_76 = arith.constant 0 : index
      %c0_77 = arith.constant 0 : index
      %138 = vector.load %arg2[%c0_76, %c0_77] : memref<16x128xf32, #tpu.memory_space<vmem>>, vector<16x128xf32>
      %cst_78 = arith.constant dense<0.000000e+00> : vector<16xf32>
      %139 = vector.multi_reduction <add>, %138, %cst_78 [1] : vector<16x128xf32> to vector<16xf32>
      %140 = vector.shape_cast %139 : vector<16xf32> to vector<16x1xf32>
      %cst_79 = arith.constant 1.280000e+02 : f32
      %141 = vector.broadcast %cst_79 : f32 to vector<16x1xf32>
      %142 = arith.divf %140, %141 : vector<16x1xf32>
      %143 = vector.broadcast %142 : vector<16x1xf32> to vector<16x128xf32>
      %144 = arith.subf %138, %143 : vector<16x128xf32>
      %145 = arith.mulf %144, %144 : vector<16x128xf32>
      %cst_80 = arith.constant dense<0.000000e+00> : vector<16xf32>
      %146 = vector.multi_reduction <add>, %145, %cst_80 [1] : vector<16x128xf32> to vector<16xf32>
      %147 = vector.shape_cast %146 : vector<16xf32> to vector<16x1xf32>
      %cst_81 = arith.constant 1.280000e+02 : f32
      %148 = vector.broadcast %cst_81 : f32 to vector<16x1xf32>
      %149 = arith.divf %147, %148 : vector<16x1xf32>
      %150 = vector.broadcast %142 : vector<16x1xf32> to vector<16x128xf32>
      %151 = arith.subf %138, %150 : vector<16x128xf32>
      %cst_82 = arith.constant 9.99999974E-6 : f32
      %152 = vector.broadcast %cst_82 : f32 to vector<16x1xf32>
      %153 = arith.addf %149, %152 : vector<16x1xf32>
      %154 = math.rsqrt %153 : vector<16x1xf32>
      %155 = vector.broadcast %154 : vector<16x1xf32> to vector<16x128xf32>
      %156 = arith.mulf %151, %155 : vector<16x128xf32>
      %c0_83 = arith.constant 0 : index
      %c0_84 = arith.constant 0 : index
      %157 = vector.load %arg9[%c0_83, %c0_84] : memref<1x128xf32, #tpu.memory_space<vmem>>, vector<1x128xf32>
      %158 = vector.broadcast %157 : vector<1x128xf32> to vector<16x128xf32>
      %159 = arith.mulf %156, %158 : vector<16x128xf32>
      %c0_85 = arith.constant 0 : index
      %c0_86 = arith.constant 0 : index
      %160 = vector.load %arg10[%c0_85, %c0_86] : memref<1x128xf32, #tpu.memory_space<vmem>>, vector<1x128xf32>
      %161 = vector.broadcast %160 : vector<1x128xf32> to vector<16x128xf32>
      %162 = arith.addf %159, %161 : vector<16x128xf32>
      %163 = arith.truncf %162 : vector<16x128xf32> to vector<16x128xbf16>
      %c0_87 = arith.constant 0 : index
      %c0_88 = arith.constant 0 : index
      %164 = vector.load %arg5[%c0_87, %c0_88] : memref<128x256xbf16, #tpu.memory_space<vmem>>, vector<128x256xbf16>
      %cst_89 = arith.constant dense<0.000000e+00> : vector<16x256xf32>
      %165 = tpu.matmul %163, %164, %cst_89 {dimension_numbers = #tpu.dot_dimension_numbers<[1], [0], [0], [1], [0, 0, 1, 1], [], []>} : vector<16x128xbf16>, vector<128x256xbf16>, vector<16x256xf32> -> vector<16x256xf32>
      %c0_90 = arith.constant 0 : index
      %c0_91 = arith.constant 0 : index
      %166 = vector.load %arg6[%c0_90, %c0_91] : memref<1x256xf32, #tpu.memory_space<vmem>>, vector<1x256xf32>
      %167 = vector.broadcast %166 : vector<1x256xf32> to vector<16x256xf32>
      %168 = arith.addf %165, %167 : vector<16x256xf32>
      %169 = arith.truncf %168 : vector<16x256xf32> to vector<16x256xbf16>
      %170 = vector.extract_strided_slice %169 {offsets = [0, 0], sizes = [16, 32], strides = [1, 1]} : vector<16x256xbf16> to vector<16x32xbf16>
      %c0_92 = arith.constant 0 : index
      %c0_93 = arith.constant 0 : index
      %c0_94 = arith.constant 0 : index
      %171 = vector.load %arg18[%c0_92, %c0_93, %c0_94] : memref<4x16x32xbf16, #tpu.memory_space<vmem>>, vector<1x16x32xbf16>
      %172 = vector.shape_cast %171 : vector<1x16x32xbf16> to vector<16x32xbf16>
      %173 = vector.shape_cast %170 : vector<16x32xbf16> to vector<1x16x32xbf16>
      tpu.vector_store %arg18[%c0_92, %c0_93, %c0_94], %173 {strides = array<i32>} : memref<4x16x32xbf16, #tpu.memory_space<vmem>>, vector<1x16x32xbf16>,
      %174 = vector.extract_strided_slice %169 {offsets = [0, 128], sizes = [16, 32], strides = [1, 1]} : vector<16x256xbf16> to vector<16x32xbf16>
      %c0_95 = arith.constant 0 : index
      %c0_96 = arith.constant 0 : index
      %c0_97 = arith.constant 0 : index
      %175 = vector.load %arg19[%c0_95, %c0_96, %c0_97] : memref<4x16x32xbf16, #tpu.memory_space<vmem>>, vector<1x16x32xbf16>
      %176 = vector.shape_cast %175 : vector<1x16x32xbf16> to vector<16x32xbf16>
      %177 = vector.shape_cast %174 : vector<16x32xbf16> to vector<1x16x32xbf16>
      tpu.vector_store %arg19[%c0_95, %c0_96, %c0_97], %177 {strides = array<i32>} : memref<4x16x32xbf16, #tpu.memory_space<vmem>>, vector<1x16x32xbf16>,
      %178 = vector.extract_strided_slice %169 {offsets = [0, 32], sizes = [16, 32], strides = [1, 1]} : vector<16x256xbf16> to vector<16x32xbf16>
      %c1_98 = arith.constant 1 : index
      %c0_99 = arith.constant 0 : index
      %c0_100 = arith.constant 0 : index
      %179 = vector.load %arg18[%c1_98, %c0_99, %c0_100] : memref<4x16x32xbf16, #tpu.memory_space<vmem>>, vector<1x16x32xbf16>
      %180 = vector.shape_cast %179 : vector<1x16x32xbf16> to vector<16x32xbf16>
      %181 = vector.shape_cast %178 : vector<16x32xbf16> to vector<1x16x32xbf16>
      tpu.vector_store %arg18[%c1_98, %c0_99, %c0_100], %181 {strides = array<i32>} : memref<4x16x32xbf16, #tpu.memory_space<vmem>>, vector<1x16x32xbf16>,
      %182 = vector.extract_strided_slice %169 {offsets = [0, 160], sizes = [16, 32], strides = [1, 1]} : vector<16x256xbf16> to vector<16x32xbf16>
      %c1_101 = arith.constant 1 : index
      %c0_102 = arith.constant 0 : index
      %c0_103 = arith.constant 0 : index
      %183 = vector.load %arg19[%c1_101, %c0_102, %c0_103] : memref<4x16x32xbf16, #tpu.memory_space<vmem>>, vector<1x16x32xbf16>
      %184 = vector.shape_cast %183 : vector<1x16x32xbf16> to vector<16x32xbf16>
      %185 = vector.shape_cast %182 : vector<16x32xbf16> to vector<1x16x32xbf16>
      tpu.vector_store %arg19[%c1_101, %c0_102, %c0_103], %185 {strides = array<i32>} : memref<4x16x32xbf16, #tpu.memory_space<vmem>>, vector<1x16x32xbf16>,
      %186 = vector.extract_strided_slice %169 {offsets = [0, 64], sizes = [16, 32], strides = [1, 1]} : vector<16x256xbf16> to vector<16x32xbf16>
      %c2_104 = arith.constant 2 : index
      %c0_105 = arith.constant 0 : index
      %c0_106 = arith.constant 0 : index
      %187 = vector.load %arg18[%c2_104, %c0_105, %c0_106] : memref<4x16x32xbf16, #tpu.memory_space<vmem>>, vector<1x16x32xbf16>
      %188 = vector.shape_cast %187 : vector<1x16x32xbf16> to vector<16x32xbf16>
      %189 = vector.shape_cast %186 : vector<16x32xbf16> to vector<1x16x32xbf16>
      tpu.vector_store %arg18[%c2_104, %c0_105, %c0_106], %189 {strides = array<i32>} : memref<4x16x32xbf16, #tpu.memory_space<vmem>>, vector<1x16x32xbf16>,
      %190 = vector.extract_strided_slice %169 {offsets = [0, 192], sizes = [16, 32], strides = [1, 1]} : vector<16x256xbf16> to vector<16x32xbf16>
      %c2_107 = arith.constant 2 : index
      %c0_108 = arith.constant 0 : index
      %c0_109 = arith.constant 0 : index
      %191 = vector.load %arg19[%c2_107, %c0_108, %c0_109] : memref<4x16x32xbf16, #tpu.memory_space<vmem>>, vector<1x16x32xbf16>
      %192 = vector.shape_cast %191 : vector<1x16x32xbf16> to vector<16x32xbf16>
      %193 = vector.shape_cast %190 : vector<16x32xbf16> to vector<1x16x32xbf16>
      tpu.vector_store %arg19[%c2_107, %c0_108, %c0_109], %193 {strides = array<i32>} : memref<4x16x32xbf16, #tpu.memory_space<vmem>>, vector<1x16x32xbf16>,
      %194 = vector.extract_strided_slice %169 {offsets = [0, 96], sizes = [16, 32], strides = [1, 1]} : vector<16x256xbf16> to vector<16x32xbf16>
      %c3_110 = arith.constant 3 : index
      %c0_111 = arith.constant 0 : index
      %c0_112 = arith.constant 0 : index
      %195 = vector.load %arg18[%c3_110, %c0_111, %c0_112] : memref<4x16x32xbf16, #tpu.memory_space<vmem>>, vector<1x16x32xbf16>
      %196 = vector.shape_cast %195 : vector<1x16x32xbf16> to vector<16x32xbf16>
      %197 = vector.shape_cast %194 : vector<16x32xbf16> to vector<1x16x32xbf16>
      tpu.vector_store %arg18[%c3_110, %c0_111, %c0_112], %197 {strides = array<i32>} : memref<4x16x32xbf16, #tpu.memory_space<vmem>>, vector<1x16x32xbf16>,
      %198 = vector.extract_strided_slice %169 {offsets = [0, 224], sizes = [16, 32], strides = [1, 1]} : vector<16x256xbf16> to vector<16x32xbf16>
      %c3_113 = arith.constant 3 : index
      %c0_114 = arith.constant 0 : index
      %c0_115 = arith.constant 0 : index
      %199 = vector.load %arg19[%c3_113, %c0_114, %c0_115] : memref<4x16x32xbf16, #tpu.memory_space<vmem>>, vector<1x16x32xbf16>
      %200 = vector.shape_cast %199 : vector<1x16x32xbf16> to vector<16x32xbf16>
      %201 = vector.shape_cast %198 : vector<16x32xbf16> to vector<1x16x32xbf16>
      tpu.vector_store %arg19[%c3_113, %c0_114, %c0_115], %201 {strides = array<i32>} : memref<4x16x32xbf16, #tpu.memory_space<vmem>>, vector<1x16x32xbf16>,
    } else {
    }
    %c8_i32 = arith.constant 8 : i32
    %3 = arith.muli %arg1, %c8_i32 : i32
    %4 = tpu.assume_multiple %3, 8 : i32
    %5 = arith.index_cast %4 : i32 to index
    %c0 = arith.constant 0 : index
    %6 = vector.load %arg2[%5, %c0] : memref<16x128xf32, #tpu.memory_space<vmem>>, vector<8x128xf32>
    %cst = arith.constant dense<0.000000e+00> : vector<8xf32>
    %7 = vector.multi_reduction <add>, %6, %cst [1] : vector<8x128xf32> to vector<8xf32>
    %8 = vector.shape_cast %7 : vector<8xf32> to vector<8x1xf32>
    %cst_1 = arith.constant 1.280000e+02 : f32
    %9 = vector.broadcast %cst_1 : f32 to vector<8x1xf32>
    %10 = arith.divf %8, %9 : vector<8x1xf32>
    %11 = vector.broadcast %10 : vector<8x1xf32> to vector<8x128xf32>
    %12 = arith.subf %6, %11 : vector<8x128xf32>
    %13 = arith.mulf %12, %12 : vector<8x128xf32>
    %cst_2 = arith.constant dense<0.000000e+00> : vector<8xf32>
    %14 = vector.multi_reduction <add>, %13, %cst_2 [1] : vector<8x128xf32> to vector<8xf32>
    %15 = vector.shape_cast %14 : vector<8xf32> to vector<8x1xf32>
    %cst_3 = arith.constant 1.280000e+02 : f32
    %16 = vector.broadcast %cst_3 : f32 to vector<8x1xf32>
    %17 = arith.divf %15, %16 : vector<8x1xf32>
    %18 = vector.broadcast %10 : vector<8x1xf32> to vector<8x128xf32>
    %19 = arith.subf %6, %18 : vector<8x128xf32>
    %cst_4 = arith.constant 9.99999974E-6 : f32
    %20 = vector.broadcast %cst_4 : f32 to vector<8x1xf32>
    %21 = arith.addf %17, %20 : vector<8x1xf32>
    %22 = math.rsqrt %21 : vector<8x1xf32>
    %23 = vector.broadcast %22 : vector<8x1xf32> to vector<8x128xf32>
    %24 = arith.mulf %19, %23 : vector<8x128xf32>
    %c0_5 = arith.constant 0 : index
    %c0_6 = arith.constant 0 : index
    %25 = vector.load %arg9[%c0_5, %c0_6] : memref<1x128xf32, #tpu.memory_space<vmem>>, vector<1x128xf32>
    %26 = vector.broadcast %25 : vector<1x128xf32> to vector<8x128xf32>
    %27 = arith.mulf %24, %26 : vector<8x128xf32>
    %c0_7 = arith.constant 0 : index
    %c0_8 = arith.constant 0 : index
    %28 = vector.load %arg10[%c0_7, %c0_8] : memref<1x128xf32, #tpu.memory_space<vmem>>, vector<1x128xf32>
    %29 = vector.broadcast %28 : vector<1x128xf32> to vector<8x128xf32>
    %30 = arith.addf %27, %29 : vector<8x128xf32>
    %31 = arith.truncf %30 : vector<8x128xf32> to vector<8x128xbf16>
    %c0_9 = arith.constant 0 : index
    %c0_10 = arith.constant 0 : index
    %32 = vector.load %arg3[%c0_9, %c0_10] : memref<128x128xbf16, #tpu.memory_space<vmem>>, vector<128x128xbf16>
    %cst_11 = arith.constant dense<0.000000e+00> : vector<8x128xf32>
    %33 = tpu.matmul %31, %32, %cst_11 {dimension_numbers = #tpu.dot_dimension_numbers<[1], [0], [0], [1], [0, 0, 1, 1], [], []>} : vector<8x128xbf16>, vector<128x128xbf16>, vector<8x128xf32> -> vector<8x128xf32>
    %c0_12 = arith.constant 0 : index
    %c0_13 = arith.constant 0 : index
    %34 = vector.load %arg4[%c0_12, %c0_13] : memref<1x128xf32, #tpu.memory_space<vmem>>, vector<1x128xf32>
    %35 = vector.broadcast %34 : vector<1x128xf32> to vector<8x128xf32>
    %36 = arith.addf %33, %35 : vector<8x128xf32>
    %37 = arith.truncf %36 : vector<8x128xf32> to vector<8x128xbf16>
    %38 = vector.extract_strided_slice %37 {offsets = [0, 0], sizes = [8, 32], strides = [1, 1]} : vector<8x128xbf16> to vector<8x32xbf16>
    %c0_14 = arith.constant 0 : index
    %c0_15 = arith.constant 0 : index
    %c0_16 = arith.constant 0 : index
    %39 = vector.load %arg20[%c0_14, %c0_15, %c0_16] : memref<4x8x32xbf16, #tpu.memory_space<vmem>>, vector<1x8x32xbf16>
    %40 = vector.shape_cast %39 : vector<1x8x32xbf16> to vector<8x32xbf16>
    %41 = vector.shape_cast %38 : vector<8x32xbf16> to vector<1x8x32xbf16>
    tpu.vector_store %arg20[%c0_14, %c0_15, %c0_16], %41 {strides = array<i32>} : memref<4x8x32xbf16, #tpu.memory_space<vmem>>, vector<1x8x32xbf16>,
    %42 = vector.extract_strided_slice %37 {offsets = [0, 32], sizes = [8, 32], strides = [1, 1]} : vector<8x128xbf16> to vector<8x32xbf16>
    %c1 = arith.constant 1 : index
    %c0_17 = arith.constant 0 : index
    %c0_18 = arith.constant 0 : index
    %43 = vector.load %arg20[%c1, %c0_17, %c0_18] : memref<4x8x32xbf16, #tpu.memory_space<vmem>>, vector<1x8x32xbf16>
    %44 = vector.shape_cast %43 : vector<1x8x32xbf16> to vector<8x32xbf16>
    %45 = vector.shape_cast %42 : vector<8x32xbf16> to vector<1x8x32xbf16>
    tpu.vector_store %arg20[%c1, %c0_17, %c0_18], %45 {strides = array<i32>} : memref<4x8x32xbf16, #tpu.memory_space<vmem>>, vector<1x8x32xbf16>,
    %46 = vector.extract_strided_slice %37 {offsets = [0, 64], sizes = [8, 32], strides = [1, 1]} : vector<8x128xbf16> to vector<8x32xbf16>
    %c2 = arith.constant 2 : index
    %c0_19 = arith.constant 0 : index
    %c0_20 = arith.constant 0 : index
    %47 = vector.load %arg20[%c2, %c0_19, %c0_20] : memref<4x8x32xbf16, #tpu.memory_space<vmem>>, vector<1x8x32xbf16>
    %48 = vector.shape_cast %47 : vector<1x8x32xbf16> to vector<8x32xbf16>
    %49 = vector.shape_cast %46 : vector<8x32xbf16> to vector<1x8x32xbf16>
    tpu.vector_store %arg20[%c2, %c0_19, %c0_20], %49 {strides = array<i32>} : memref<4x8x32xbf16, #tpu.memory_space<vmem>>, vector<1x8x32xbf16>,
    %50 = vector.extract_strided_slice %37 {offsets = [0, 96], sizes = [8, 32], strides = [1, 1]} : vector<8x128xbf16> to vector<8x32xbf16>
    %c3 = arith.constant 3 : index
    %c0_21 = arith.constant 0 : index
    %c0_22 = arith.constant 0 : index
    %51 = vector.load %arg20[%c3, %c0_21, %c0_22] : memref<4x8x32xbf16, #tpu.memory_space<vmem>>, vector<1x8x32xbf16>
    %52 = vector.shape_cast %51 : vector<1x8x32xbf16> to vector<8x32xbf16>
    %53 = vector.shape_cast %50 : vector<8x32xbf16> to vector<1x8x32xbf16>
    tpu.vector_store %arg20[%c3, %c0_21, %c0_22], %53 {strides = array<i32>} : memref<4x8x32xbf16, #tpu.memory_space<vmem>>, vector<1x8x32xbf16>,
    %c0_23 = arith.constant 0 : index
    %c0_24 = arith.constant 0 : index
    %c0_25 = arith.constant 0 : index
    %54 = vector.load %arg20[%c0_23, %c0_24, %c0_25] : memref<4x8x32xbf16, #tpu.memory_space<vmem>>, vector<4x8x32xbf16>
    %c0_26 = arith.constant 0 : index
    %c0_27 = arith.constant 0 : index
    %c0_28 = arith.constant 0 : index
    %55 = vector.load %arg18[%c0_26, %c0_27, %c0_28] : memref<4x16x32xbf16, #tpu.memory_space<vmem>>, vector<4x16x32xbf16>
    %c0_29 = arith.constant 0 : index
    %c0_30 = arith.constant 0 : index
    %c0_31 = arith.constant 0 : index
    %56 = vector.load %arg19[%c0_29, %c0_30, %c0_31] : memref<4x16x32xbf16, #tpu.memory_space<vmem>>, vector<4x16x32xbf16>
    "tpu.trace_start"() <{level = 10 : i32, message = "hqd,hkd->hqk"}> : () -> ()
    %cst_32 = arith.constant dense<0.000000e+00> : vector<4x8x16xf32>
    %57 = tpu.matmul %54, %55, %cst_32 {dimension_numbers = #tpu.dot_dimension_numbers<[2], [2], [1], [1], [0, 0, 0, 1, 1, 1], [0], [0]>} : vector<4x8x32xbf16>, vector<4x16x32xbf16>, vector<4x8x16xf32> -> vector<4x8x16xf32>
    "tpu.trace_stop"() : () -> ()
    %cst_33 = arith.constant dense<0xFF800000> : vector<4x8xf32>
    %58 = vector.multi_reduction <maximumf>, %57, %cst_33 [2] : vector<4x8x16xf32> to vector<4x8xf32>
    %59 = vector.shape_cast %58 : vector<4x8xf32> to vector<4x8x1xf32>
    %60 = vector.broadcast %59 : vector<4x8x1xf32> to vector<4x8x16xf32>
    %61 = arith.subf %57, %60 : vector<4x8x16xf32>
    %62 = math.exp %61 : vector<4x8x16xf32>
    %cst_34 = arith.constant dense<0.000000e+00> : vector<4x8xf32>
    %63 = vector.multi_reduction <add>, %62, %cst_34 [2] : vector<4x8x16xf32> to vector<4x8xf32>
    %64 = vector.shape_cast %63 : vector<4x8xf32> to vector<4x8x1xf32>
    %65 = arith.truncf %62 : vector<4x8x16xf32> to vector<4x8x16xbf16>
    "tpu.trace_start"() <{level = 10 : i32, message = "hqk,hkd->hqd"}> : () -> ()
    %cst_35 = arith.constant dense<0.000000e+00> : vector<4x8x32xf32>
    %66 = tpu.matmul %65, %56, %cst_35 {dimension_numbers = #tpu.dot_dimension_numbers<[2], [1], [1], [2], [0, 0, 0, 1, 1, 2], [0], [0]>} : vector<4x8x16xbf16>, vector<4x16x32xbf16>, vector<4x8x32xf32> -> vector<4x8x32xf32>
    "tpu.trace_stop"() : () -> ()
    %67 = tpu.reciprocal %64 {approx = true} : vector<4x8x1xf32> -> vector<4x8x1xf32>
    %68 = vector.broadcast %67 : vector<4x8x1xf32> to vector<4x8x32xf32>
    %69 = arith.mulf %66, %68 : vector<4x8x32xf32>
    %70 = arith.truncf %69 : vector<4x8x32xf32> to vector<4x8x32xbf16>
    %71 = vector.extract_strided_slice %70 {offsets = [0, 0, 0], sizes = [1, 8, 32], strides = [1, 1, 1]} : vector<4x8x32xbf16> to vector<1x8x32xbf16>
    %72 = vector.shape_cast %71 : vector<1x8x32xbf16> to vector<8x32xbf16>
    %c0_36 = arith.constant 0 : index
    %c0_37 = arith.constant 0 : index
    %c0_38 = arith.constant 0 : index
    %73 = vector.load %arg7[%c0_36, %c0_37, %c0_38] : memref<4x32x128xbf16, #tpu.memory_space<vmem>>, vector<1x32x128xbf16>
    %74 = vector.shape_cast %73 : vector<1x32x128xbf16> to vector<32x128xbf16>
    %cst_39 = arith.constant dense<0.000000e+00> : vector<8x128xf32>
    %75 = tpu.matmul %72, %74, %cst_39 {dimension_numbers = #tpu.dot_dimension_numbers<[1], [0], [0], [1], [0, 0, 1, 1], [], []>} : vector<8x32xbf16>, vector<32x128xbf16>, vector<8x128xf32> -> vector<8x128xf32>
    %76 = vector.extract_strided_slice %70 {offsets = [1, 0, 0], sizes = [1, 8, 32], strides = [1, 1, 1]} : vector<4x8x32xbf16> to vector<1x8x32xbf16>
    %77 = vector.shape_cast %76 : vector<1x8x32xbf16> to vector<8x32xbf16>
    %c1_40 = arith.constant 1 : index
    %c0_41 = arith.constant 0 : index
    %c0_42 = arith.constant 0 : index
    %78 = vector.load %arg7[%c1_40, %c0_41, %c0_42] : memref<4x32x128xbf16, #tpu.memory_space<vmem>>, vector<1x32x128xbf16>
    %79 = vector.shape_cast %78 : vector<1x32x128xbf16> to vector<32x128xbf16>
    %cst_43 = arith.constant dense<0.000000e+00> : vector<8x128xf32>
    %80 = tpu.matmul %77, %79, %cst_43 {dimension_numbers = #tpu.dot_dimension_numbers<[1], [0], [0], [1], [0, 0, 1, 1], [], []>} : vector<8x32xbf16>, vector<32x128xbf16>, vector<8x128xf32> -> vector<8x128xf32>
    %81 = arith.addf %75, %80 : vector<8x128xf32>
    %82 = vector.extract_strided_slice %70 {offsets = [2, 0, 0], sizes = [1, 8, 32], strides = [1, 1, 1]} : vector<4x8x32xbf16> to vector<1x8x32xbf16>
    %83 = vector.shape_cast %82 : vector<1x8x32xbf16> to vector<8x32xbf16>
    %c2_44 = arith.constant 2 : index
    %c0_45 = arith.constant 0 : index
    %c0_46 = arith.constant 0 : index
    %84 = vector.load %arg7[%c2_44, %c0_45, %c0_46] : memref<4x32x128xbf16, #tpu.memory_space<vmem>>, vector<1x32x128xbf16>
    %85 = vector.shape_cast %84 : vector<1x32x128xbf16> to vector<32x128xbf16>
    %cst_47 = arith.constant dense<0.000000e+00> : vector<8x128xf32>
    %86 = tpu.matmul %83, %85, %cst_47 {dimension_numbers = #tpu.dot_dimension_numbers<[1], [0], [0], [1], [0, 0, 1, 1], [], []>} : vector<8x32xbf16>, vector<32x128xbf16>, vector<8x128xf32> -> vector<8x128xf32>
    %87 = arith.addf %81, %86 : vector<8x128xf32>
    %88 = vector.extract_strided_slice %70 {offsets = [3, 0, 0], sizes = [1, 8, 32], strides = [1, 1, 1]} : vector<4x8x32xbf16> to vector<1x8x32xbf16>
    %89 = vector.shape_cast %88 : vector<1x8x32xbf16> to vector<8x32xbf16>
    %c3_48 = arith.constant 3 : index
    %c0_49 = arith.constant 0 : index
    %c0_50 = arith.constant 0 : index
    %90 = vector.load %arg7[%c3_48, %c0_49, %c0_50] : memref<4x32x128xbf16, #tpu.memory_space<vmem>>, vector<1x32x128xbf16>
    %91 = vector.shape_cast %90 : vector<1x32x128xbf16> to vector<32x128xbf16>
    %cst_51 = arith.constant dense<0.000000e+00> : vector<8x128xf32>
    %92 = tpu.matmul %89, %91, %cst_51 {dimension_numbers = #tpu.dot_dimension_numbers<[1], [0], [0], [1], [0, 0, 1, 1], [], []>} : vector<8x32xbf16>, vector<32x128xbf16>, vector<8x128xf32> -> vector<8x128xf32>
    %93 = arith.addf %87, %92 : vector<8x128xf32>
    %c0_52 = arith.constant 0 : index
    %c0_53 = arith.constant 0 : index
    %94 = vector.load %arg8[%c0_52, %c0_53] : memref<1x128xf32, #tpu.memory_space<vmem>>, vector<1x128xf32>
    %95 = vector.broadcast %94 : vector<1x128xf32> to vector<8x128xf32>
    %96 = arith.addf %93, %95 : vector<8x128xf32>
    %97 = arith.addf %6, %96 : vector<8x128xf32>
    %cst_54 = arith.constant dense<0.000000e+00> : vector<8xf32>
    %98 = vector.multi_reduction <add>, %97, %cst_54 [1] : vector<8x128xf32> to vector<8xf32>
    %99 = vector.shape_cast %98 : vector<8xf32> to vector<8x1xf32>
    %cst_55 = arith.constant 1.280000e+02 : f32
    %100 = vector.broadcast %cst_55 : f32 to vector<8x1xf32>
    %101 = arith.divf %99, %100 : vector<8x1xf32>
    %102 = vector.broadcast %101 : vector<8x1xf32> to vector<8x128xf32>
    %103 = arith.subf %97, %102 : vector<8x128xf32>
    %104 = arith.mulf %103, %103 : vector<8x128xf32>
    %cst_56 = arith.constant dense<0.000000e+00> : vector<8xf32>
    %105 = vector.multi_reduction <add>, %104, %cst_56 [1] : vector<8x128xf32> to vector<8xf32>
    %106 = vector.shape_cast %105 : vector<8xf32> to vector<8x1xf32>
    %cst_57 = arith.constant 1.280000e+02 : f32
    %107 = vector.broadcast %cst_57 : f32 to vector<8x1xf32>
    %108 = arith.divf %106, %107 : vector<8x1xf32>
    %109 = vector.broadcast %101 : vector<8x1xf32> to vector<8x128xf32>
    %110 = arith.subf %97, %109 : vector<8x128xf32>
    %cst_58 = arith.constant 9.99999974E-6 : f32
    %111 = vector.broadcast %cst_58 : f32 to vector<8x1xf32>
    %112 = arith.addf %108, %111 : vector<8x1xf32>
    %113 = math.rsqrt %112 : vector<8x1xf32>
    %114 = vector.broadcast %113 : vector<8x1xf32> to vector<8x128xf32>
    %115 = arith.mulf %110, %114 : vector<8x128xf32>
    %c0_59 = arith.constant 0 : index
    %c0_60 = arith.constant 0 : index
    %116 = vector.load %arg11[%c0_59, %c0_60] : memref<1x128xf32, #tpu.memory_space<vmem>>, vector<1x128xf32>
    %117 = vector.broadcast %116 : vector<1x128xf32> to vector<8x128xf32>
    %118 = arith.mulf %115, %117 : vector<8x128xf32>
    %c0_61 = arith.constant 0 : index
    %c0_62 = arith.constant 0 : index
    %119 = vector.load %arg12[%c0_61, %c0_62] : memref<1x128xf32, #tpu.memory_space<vmem>>, vector<1x128xf32>
    %120 = vector.broadcast %119 : vector<1x128xf32> to vector<8x128xf32>
    %121 = arith.addf %118, %120 : vector<8x128xf32>
    %122 = arith.truncf %121 : vector<8x128xf32> to vector<8x128xbf16>
    %c0_63 = arith.constant 0 : index
    %c0_64 = arith.constant 0 : index
    %123 = vector.load %arg13[%c0_63, %c0_64] : memref<128x512xbf16, #tpu.memory_space<vmem>>, vector<128x512xbf16>
    %cst_65 = arith.constant dense<0.000000e+00> : vector<8x512xf32>
    %124 = tpu.matmul %122, %123, %cst_65 {dimension_numbers = #tpu.dot_dimension_numbers<[1], [0], [0], [1], [0, 0, 1, 1], [], []>} : vector<8x128xbf16>, vector<128x512xbf16>, vector<8x512xf32> -> vector<8x512xf32>
    %c0_66 = arith.constant 0 : index
    %c0_67 = arith.constant 0 : index
    %125 = vector.load %arg14[%c0_66, %c0_67] : memref<1x512xf32, #tpu.memory_space<vmem>>, vector<1x512xf32>
    %126 = vector.broadcast %125 : vector<1x512xf32> to vector<8x512xf32>
    %127 = arith.addf %124, %126 : vector<8x512xf32>
    %cst_68 = arith.constant 0.000000e+00 : f32
    %128 = vector.broadcast %cst_68 : f32 to vector<8x512xf32>
    %129 = arith.maximumf %127, %128 : vector<8x512xf32>
    %130 = arith.truncf %129 : vector<8x512xf32> to vector<8x512xbf16>
    %c0_69 = arith.constant 0 : index
    %c0_70 = arith.constant 0 : index
    %131 = vector.load %arg15[%c0_69, %c0_70] : memref<512x128xbf16, #tpu.memory_space<vmem>>, vector<512x128xbf16>
    %cst_71 = arith.constant dense<0.000000e+00> : vector<8x128xf32>
    %132 = tpu.matmul %130, %131, %cst_71 {dimension_numbers = #tpu.dot_dimension_numbers<[1], [0], [0], [1], [0, 0, 1, 1], [], []>} : vector<8x512xbf16>, vector<512x128xbf16>, vector<8x128xf32> -> vector<8x128xf32>
    %c0_72 = arith.constant 0 : index
    %c0_73 = arith.constant 0 : index
    %133 = vector.load %arg16[%c0_72, %c0_73] : memref<1x128xf32, #tpu.memory_space<vmem>>, vector<1x128xf32>
    %134 = vector.broadcast %133 : vector<1x128xf32> to vector<8x128xf32>
    %135 = arith.addf %132, %134 : vector<8x128xf32>
    %136 = arith.addf %97, %135 : vector<8x128xf32>
    %c0_74 = arith.constant 0 : index
    %c0_75 = arith.constant 0 : index
    %137 = vector.load %arg17[%c0_74, %c0_75] : memref<8x128xf32, #tpu.memory_space<vmem>>, vector<8x128xf32>
    tpu.vector_store %arg17[%c0_74, %c0_75], %136 {strides = array<i32>} : memref<8x128xf32, #tpu.memory_space<vmem>>, vector<8x128xf32>,
    return
  }
  func.func @transform_0(%arg0: i32, %arg1: i32) -> (i32, i32) {
    %c0_i32 = arith.constant 0 : i32
    %c0_i32_0 = arith.constant 0 : i32
    return %c0_i32, %arg0 : i32, i32
  }
  func.func @transform_1(%arg0: i32, %arg1: i32) -> (i32, i32) {
    %c0_i32 = arith.constant 0 : i32
    %c0_i32_0 = arith.constant 0 : i32
    %c0_i32_1 = arith.constant 0 : i32
    return %c0_i32, %c0_i32_0 : i32, i32
  }
  func.func @transform_2(%arg0: i32, %arg1: i32) -> (i32, i32) {
    %c0_i32 = arith.constant 0 : i32
    %c0_i32_0 = arith.constant 0 : i32
    %c0_i32_1 = arith.constant 0 : i32
    return %c0_i32, %c0_i32_0 : i32, i32
  }
  func.func @transform_3(%arg0: i32, %arg1: i32) -> (i32, i32) {
    %c0_i32 = arith.constant 0 : i32
    %c0_i32_0 = arith.constant 0 : i32
    %c0_i32_1 = arith.constant 0 : i32
    return %c0_i32, %c0_i32_0 : i32, i32
  }
  func.func @transform_4(%arg0: i32, %arg1: i32) -> (i32, i32) {
    %c0_i32 = arith.constant 0 : i32
    %c0_i32_0 = arith.constant 0 : i32
    %c0_i32_1 = arith.constant 0 : i32
    return %c0_i32, %c0_i32_0 : i32, i32
  }
  func.func @transform_5(%arg0: i32, %arg1: i32) -> (i32, i32, i32) {
    %c0_i32 = arith.constant 0 : i32
    %c0_i32_0 = arith.constant 0 : i32
    %c0_i32_1 = arith.constant 0 : i32
    %c0_i32_2 = arith.constant 0 : i32
    return %c0_i32, %c0_i32_0, %c0_i32_1 : i32, i32, i32
  }
  func.func @transform_6(%arg0: i32, %arg1: i32) -> (i32, i32) {
    %c0_i32 = arith.constant 0 : i32
    %c0_i32_0 = arith.constant 0 : i32
    %c0_i32_1 = arith.constant 0 : i32
    return %c0_i32, %c0_i32_0 : i32, i32
  }
  func.func @transform_7(%arg0: i32, %arg1: i32) -> (i32, i32) {
    %c0_i32 = arith.constant 0 : i32
    %c0_i32_0 = arith.constant 0 : i32
    %c0_i32_1 = arith.constant 0 : i32
    return %c0_i32, %c0_i32_0 : i32, i32
  }
  func.func @transform_8(%arg0: i32, %arg1: i32) -> (i32, i32) {
    %c0_i32 = arith.constant 0 : i32
    %c0_i32_0 = arith.constant 0 : i32
    %c0_i32_1 = arith.constant 0 : i32
    return %c0_i32, %c0_i32_0 : i32, i32
  }
  func.func @transform_9(%arg0: i32, %arg1: i32) -> (i32, i32) {
    %c0_i32 = arith.constant 0 : i32
    %c0_i32_0 = arith.constant 0 : i32
    %c0_i32_1 = arith.constant 0 : i32
    return %c0_i32, %c0_i32_0 : i32, i32
  }
  func.func @transform_10(%arg0: i32, %arg1: i32) -> (i32, i32) {
    %c0_i32 = arith.constant 0 : i32
    %c0_i32_0 = arith.constant 0 : i32
    %c0_i32_1 = arith.constant 0 : i32
    return %c0_i32, %c0_i32_0 : i32, i32
  }
  func.func @transform_11(%arg0: i32, %arg1: i32) -> (i32, i32) {
    %c0_i32 = arith.constant 0 : i32
    %c0_i32_0 = arith.constant 0 : i32
    %c0_i32_1 = arith.constant 0 : i32
    return %c0_i32, %c0_i32_0 : i32, i32
  }
  func.func @transform_12(%arg0: i32, %arg1: i32) -> (i32, i32) {
    %c0_i32 = arith.constant 0 : i32
    %c0_i32_0 = arith.constant 0 : i32
    %c0_i32_1 = arith.constant 0 : i32
    return %c0_i32, %c0_i32_0 : i32, i32
  }
  func.func @transform_13(%arg0: i32, %arg1: i32) -> (i32, i32) {
    %c0_i32 = arith.constant 0 : i32
    %c0_i32_0 = arith.constant 0 : i32
    %c0_i32_1 = arith.constant 0 : i32
    return %c0_i32, %c0_i32_0 : i32, i32
  }
  func.func @transform_14(%arg0: i32, %arg1: i32) -> (i32, i32) {
    %c0_i32 = arith.constant 0 : i32
    %c0_i32_0 = arith.constant 0 : i32
    %c0_i32_1 = arith.constant 0 : i32
    return %c0_i32, %c0_i32_0 : i32, i32
  }
  func.func @transform_15(%arg0: i32, %arg1: i32) -> (i32, i32) {
    %c0_i32 = arith.constant 0 : i32
    return %arg1, %arg0 : i32, i32
  }
}

</mosaic_0001>

<llo_original>
// kernel: tpu_custom_call.1
$region0: #{tpu_custom_call.1}
  #allocation0 [shape = 'u32[]', space=smem, size = 0x4, offset = 0x4, fixed_abs, tag = 'smem constant byte address 0x4 - core index']
  #allocation1 [shape = 'u32[144,128]{1,0:T(1,128)}', space=vmem, size = 0x12000, scoped, tag = 'internal scratch']
  #allocation2 [shape = 'bf16[4,16,32]{2,1,0:T(16,128)(2,1)}', space=vmem, size = 0x4000, scoped, tag = 'scratch operand']
  #allocation3 [shape = 'bf16[4,16,32]{2,1,0:T(16,128)(2,1)}', space=vmem, size = 0x4000, scoped, tag = 'scratch operand']
  #allocation4 [shape = 'bf16[4,8,32]{2,1,0:T(8,128)(2,1)}', space=vmem, size = 0x2000, scoped, tag = 'scratch operand']
  %s0 = inlined_call_operand.hbm [shape: f32[16,256], index: 0, kind: input, shape index: {}]
  %s1 = inlined_call_operand.hbm [shape: bf16[128,128], index: 1, kind: input, shape index: {}]
  %s2 = inlined_call_operand.vmem [shape: f32[1,128], index: 2, kind: input, shape index: {}]
  %s3 = inlined_call_operand.hbm [shape: bf16[128,256], index: 3, kind: input, shape index: {}]
  %s4 = inlined_call_operand.vmem [shape: f32[1,256], index: 4, kind: input, shape index: {}]
  %s5 = inlined_call_operand.hbm [shape: bf16[4,32,128], index: 5, kind: input, shape index: {}]
  %s6 = inlined_call_operand.vmem [shape: f32[1,128], index: 6, kind: input, shape index: {}]
  %s7 = inlined_call_operand.vmem [shape: f32[1,128], index: 7, kind: input, shape index: {}]
  %s8 = inlined_call_operand.vmem [shape: f32[1,128], index: 8, kind: input, shape index: {}]
  %s9 = inlined_call_operand.vmem [shape: f32[1,128], index: 9, kind: input, shape index: {}]
  %s10 = inlined_call_operand.vmem [shape: f32[1,128], index: 10, kind: input, shape index: {}]
  %s11 = inlined_call_operand.hbm [shape: bf16[128,512], index: 11, kind: input, shape index: {}]
  %s12 = inlined_call_operand.vmem [shape: f32[1,512], index: 12, kind: input, shape index: {}]
  %s13 = inlined_call_operand.hbm [shape: bf16[512,128], index: 13, kind: input, shape index: {}]
  %s14 = inlined_call_operand.vmem [shape: f32[1,128], index: 14, kind: input, shape index: {}]
  %s15 = inlined_call_operand.hbm [shape: f32[16,256], index: 15, kind: output, shape index: {}]
  %s16 = sld [smem:[#allocation0]]
  $region121: #{tpu_custom_call.1} parent=0
    _
  %s18 = ssub.s32 1, %s16
  %s19 = scalar_select 0, %s18, %s16
  $region1: #{tpu_custom_call.1} parent=0
    #allocation5 [shape = 'u8[16384]{0}', space=vmem, size = 0x4000, scoped, tag = 'input window, operand 0']
    #allocation6 [shape = 's32[2]{0}', space=sflag, size = 0x8, scoped, tag = 'scoped memory for tpu_custom_call.1']
    #allocation7 [shape = 's32[2]{0}', space=sflag, size = 0x8, scoped, tag = 'scoped memory for tpu_custom_call.1']
    #allocation8 [shape = 'u8[32768]{0}', space=vmem, size = 0x8000, scoped, tag = 'input window, operand 1, single buffered']
    #allocation9 [shape = 's32[1]{0}', space=sflag, size = 0x4, scoped, tag = 'scoped memory for tpu_custom_call.1']
    #allocation10 [shape = 'u8[65536]{0}', space=vmem, size = 0x10000, scoped, tag = 'input window, operand 3, single buffered']
    #allocation11 [shape = 'u8[32768]{0}', space=vmem, size = 0x8000, scoped, tag = 'input window, operand 5, single buffered']
    #allocation12 [shape = 's32[1]{0}', space=sflag, size = 0x4, scoped, tag = 'scoped memory for tpu_custom_call.1']
    #allocation13 [shape = 'u8[131072]{0}', space=vmem, size = 0x20000, scoped, tag = 'input window, operand 11, single buffered']
    #allocation14 [shape = 'u8[131072]{0}', space=vmem, size = 0x20000, scoped, tag = 'input window, operand 13, single buffered']
    #allocation15 [shape = 's32[1]{0}', space=sflag, size = 0x4, scoped, tag = 'scoped memory for tpu_custom_call.1']
    #allocation16 [shape = 'u8[8192]{0}', space=vmem, size = 0x2000, scoped, tag = 'output window, operand 0']
    %20 = vsyncpa [#allocation6], 0
    %s21 = scalar_lea.sflag [#allocation6], 1
    %22 = vsyncpa %s21, 0
    %23 = vsyncpa [#allocation9], 0
    %24 = vsyncpa [#allocation12], 0
    %25 = vsyncpa [#allocation15], 0
    %26 = vsyncpa [#allocation7], 0
    %s27 = scalar_lea.sflag [#allocation7], 1
    %28 = vsyncpa %s27, 0
    loop: start=0, step=1, limit=6
    $region2: #{tpu_custom_call.1} parent=1 // loop_pre_header
      _
    $region3: #{tpu_custom_call.1} parent=1 // loop_header
      %s30 = sphi 0, %s34
      %p31 = scmp.ge.s32.totalorder %s30, 6
      %s37 = sphi 0, %s49
      %s38 = sphi 0, %s45
      %s39 = sphi 0, %s37
      %s40 = sphi 0, %s38
      %s41 = sphi 0, %s39
      %s42 = sphi 0, %s40
      %s52 = sphi 0, %s54
      %s55 = sphi 0, %s52
      %s56 = sphi 0, %s55
      %s72 = sphi 0, %s56
      %s76 = sphi 0, %s76
      %s78 = sphi 0, %s76
      %s79 = sphi 0, %s78
      %s93 = sphi 0, %s79
      %s97 = sphi 0, %s97
      %s99 = sphi 0, %s97
      %s100 = sphi 0, %s99
      %s114 = sphi 0, %s100
      %s118 = sphi 0, %s118
      %s120 = sphi 0, %s118
      %s121 = sphi 0, %s120
      %s135 = sphi 0, %s121
      %s139 = sphi 0, %s139
      %s141 = sphi 0, %s139
      %s142 = sphi 0, %s141
      %s156 = sphi 0, %s142
      %s160 = sphi 0, %s160
      %s162 = sphi 0, %s160
      %s163 = sphi 0, %s162
      %s177 = sphi 0, %s163
      %s181 = sphi 0, %s181
      %s183 = sphi 0, %s181
      %s184 = sphi 0, %s183
      %s198 = sphi 0, %s184
      %s202 = sphi 0, %s202
      %s204 = sphi 0, %s202
      %s205 = sphi 0, %s204
      %s219 = sphi 0, %s205
      %s223 = sphi 0, %s223
      %s225 = sphi 0, %s223
      %s226 = sphi 0, %s225
      %s240 = sphi 0, %s226
      %s244 = sphi 0, %s244
      %s246 = sphi 0, %s244
      %s247 = sphi 0, %s246
      %s261 = sphi 0, %s247
      %s265 = sphi 0, %s265
      %s267 = sphi 0, %s265
      %s268 = sphi 0, %s267
      %s282 = sphi 0, %s268
      %s286 = sphi 0, %s286
      %s288 = sphi 0, %s286
      %s289 = sphi 0, %s288
      %s303 = sphi 0, %s289
      %s307 = sphi 0, %s307
      %s309 = sphi 0, %s307
      %s310 = sphi 0, %s309
      %s324 = sphi 0, %s310
      %s328 = sphi 0, %s328
      %s330 = sphi 0, %s328
      %s331 = sphi 0, %s330
      %s345 = sphi 0, %s331
      %s349 = sphi 0, %s349
      %s351 = sphi 0, %s349
      %s352 = sphi 0, %s351
      %s366 = sphi 0, %s352
      %s374 = sphi 0, %s376
      %s377 = sphi 0, %s374
      %s378 = sphi 0, %s377
      %s394 = sphi 0, %s378
    $region4: #{tpu_custom_call.1} parent=1 // loop_header_branch
      %33 = sbr.rel (%p31) target = $region8
    $region5: #{tpu_custom_call.1} parent=1 // loop_body
      %s35 = ssub.s32 %s30, 1
      %s36 = ssub.s32 %s30, 2
      %s43 = sadd.s32 1, %s38
      %p44 = scmp.ge.s32.totalorder %s43, 2
      %s45 = scalar_select %p44, 0, %s43
      %s46 = sadd.s32 1, %s37
      %s47 = scalar_select %p44, %s46, %s37
      %p48 = scmp.ge.s32.totalorder %s47, 2
      %s49 = scalar_select %p48, 0, %s47
      %s50 = ssub.s32 %s37, %s49
      %p51 = scmp.eq.s32.totalorder %s50, 0
      %s53 = sadd.s32 %s52, 1
      %s54 = scalar_select %p51, %s52, %s53
      %p57 = pneg %p51
      %p58 = scmp.eq.s32.totalorder %s30, 3
      %p59 = por %p57, %p58
      %p60 = scmp.ne.s32.totalorder %s52, %s55
      %p61 = scmp.eq.s32.totalorder %s30, 0
      %p62 = por %p60, %p61
      %p63 = scmp.ne.s32.totalorder %s52, %s55
      %p64 = scmp.eq.s32.totalorder %s35, 3
      %p65 = por %p63, %p64
      %p66 = scmp.ne.s32.totalorder %s55, %s56
      %p67 = scmp.eq.s32.totalorder %s35, 0
      %p68 = por %p66, %p67
      %p69 = scmp.ne.s32.totalorder %s55, %s56
      %p70 = scmp.eq.s32.totalorder %s36, 3
      %p71 = por %p69, %p70
      %p73 = scmp.ne.s32.totalorder %s56, %s72
      %p74 = scmp.eq.s32.totalorder %s36, 0
      %p75 = por %p73, %p74
      %s77 = sadd.s32 %s76, 1
      %p80 = scmp.eq.s32.totalorder %s30, 3
      %p81 = scmp.ne.s32.totalorder %s76, %s78
      %p82 = scmp.eq.s32.totalorder %s30, 0
      %p83 = por %p81, %p82
      %p84 = scmp.ne.s32.totalorder %s76, %s78
      %p85 = scmp.eq.s32.totalorder %s35, 3
      %p86 = por %p84, %p85
      %p87 = scmp.ne.s32.totalorder %s78, %s79
      %p88 = scmp.eq.s32.totalorder %s35, 0
      %p89 = por %p87, %p88
      %p90 = scmp.ne.s32.totalorder %s78, %s79
      %p91 = scmp.eq.s32.totalorder %s36, 3
      %p92 = por %p90, %p91
      %p94 = scmp.ne.s32.totalorder %s79, %s93
      %p95 = scmp.eq.s32.totalorder %s36, 0
      %p96 = por %p94, %p95
      %s98 = sadd.s32 %s97, 1
      %p101 = scmp.eq.s32.totalorder %s30, 3
      %p102 = scmp.ne.s32.totalorder %s97, %s99
      %p103 = scmp.eq.s32.totalorder %s30, 0
      %p104 = por %p102, %p103
      %p105 = scmp.ne.s32.totalorder %s97, %s99
      %p106 = scmp.eq.s32.totalorder %s35, 3
      %p107 = por %p105, %p106
      %p108 = scmp.ne.s32.totalorder %s99, %s100
      %p109 = scmp.eq.s32.totalorder %s35, 0
      %p110 = por %p108, %p109
      %p111 = scmp.ne.s32.totalorder %s99, %s100
      %p112 = scmp.eq.s32.totalorder %s36, 3
      %p113 = por %p111, %p112
      %p115 = scmp.ne.s32.totalorder %s100, %s114
      %p116 = scmp.eq.s32.totalorder %s36, 0
      %p117 = por %p115, %p116
      %s119 = sadd.s32 %s118, 1
      %p122 = scmp.eq.s32.totalorder %s30, 3
      %p123 = scmp.ne.s32.totalorder %s118, %s120
      %p124 = scmp.eq.s32.totalorder %s30, 0
      %p125 = por %p123, %p124
      %p126 = scmp.ne.s32.totalorder %s118, %s120
      %p127 = scmp.eq.s32.totalorder %s35, 3
      %p128 = por %p126, %p127
      %p129 = scmp.ne.s32.totalorder %s120, %s121
      %p130 = scmp.eq.s32.totalorder %s35, 0
      %p131 = por %p129, %p130
      %p132 = scmp.ne.s32.totalorder %s120, %s121
      %p133 = scmp.eq.s32.totalorder %s36, 3
      %p134 = por %p132, %p133
      %p136 = scmp.ne.s32.totalorder %s121, %s135
      %p137 = scmp.eq.s32.totalorder %s36, 0
      %p138 = por %p136, %p137
      %s140 = sadd.s32 %s139, 1
      %p143 = scmp.eq.s32.totalorder %s30, 3
      %p144 = scmp.ne.s32.totalorder %s139, %s141
      %p145 = scmp.eq.s32.totalorder %s30, 0
      %p146 = por %p144, %p145
      %p147 = scmp.ne.s32.totalorder %s139, %s141
      %p148 = scmp.eq.s32.totalorder %s35, 3
      %p149 = por %p147, %p148
      %p150 = scmp.ne.s32.totalorder %s141, %s142
      %p151 = scmp.eq.s32.totalorder %s35, 0
      %p152 = por %p150, %p151
      %p153 = scmp.ne.s32.totalorder %s141, %s142
      %p154 = scmp.eq.s32.totalorder %s36, 3
      %p155 = por %p153, %p154
      %p157 = scmp.ne.s32.totalorder %s142, %s156
      %p158 = scmp.eq.s32.totalorder %s36, 0
      %p159 = por %p157, %p158
      %s161 = sadd.s32 %s160, 1
      %p164 = scmp.eq.s32.totalorder %s30, 3
      %p165 = scmp.ne.s32.totalorder %s160, %s162
      %p166 = scmp.eq.s32.totalorder %s30, 0
      %p167 = por %p165, %p166
      %p168 = scmp.ne.s32.totalorder %s160, %s162
      %p169 = scmp.eq.s32.totalorder %s35, 3
      %p170 = por %p168, %p169
      %p171 = scmp.ne.s32.totalorder %s162, %s163
      %p172 = scmp.eq.s32.totalorder %s35, 0
      %p173 = por %p171, %p172
      %p174 = scmp.ne.s32.totalorder %s162, %s163
      %p175 = scmp.eq.s32.totalorder %s36, 3
      %p176 = por %p174, %p175
      %p178 = scmp.ne.s32.totalorder %s163, %s177
      %p179 = scmp.eq.s32.totalorder %s36, 0
      %p180 = por %p178, %p179
      %s182 = sadd.s32 %s181, 1
      %p185 = scmp.eq.s32.totalorder %s30, 3
      %p186 = scmp.ne.s32.totalorder %s181, %s183
      %p187 = scmp.eq.s32.totalorder %s30, 0
      %p188 = por %p186, %p187
      %p189 = scmp.ne.s32.totalorder %s181, %s183
      %p190 = scmp.eq.s32.totalorder %s35, 3
      %p191 = por %p189, %p190
      %p192 = scmp.ne.s32.totalorder %s183, %s184
      %p193 = scmp.eq.s32.totalorder %s35, 0
      %p194 = por %p192, %p193
      %p195 = scmp.ne.s32.totalorder %s183, %s184
      %p196 = scmp.eq.s32.totalorder %s36, 3
      %p197 = por %p195, %p196
      %p199 = scmp.ne.s32.totalorder %s184, %s198
      %p200 = scmp.eq.s32.totalorder %s36, 0
      %p201 = por %p199, %p200
      %s203 = sadd.s32 %s202, 1
      %p206 = scmp.eq.s32.totalorder %s30, 3
      %p207 = scmp.ne.s32.totalorder %s202, %s204
      %p208 = scmp.eq.s32.totalorder %s30, 0
      %p209 = por %p207, %p208
      %p210 = scmp.ne.s32.totalorder %s202, %s204
      %p211 = scmp.eq.s32.totalorder %s35, 3
      %p212 = por %p210, %p211
      %p213 = scmp.ne.s32.totalorder %s204, %s205
      %p214 = scmp.eq.s32.totalorder %s35, 0
      %p215 = por %p213, %p214
      %p216 = scmp.ne.s32.totalorder %s204, %s205
      %p217 = scmp.eq.s32.totalorder %s36, 3
      %p218 = por %p216, %p217
      %p220 = scmp.ne.s32.totalorder %s205, %s219
      %p221 = scmp.eq.s32.totalorder %s36, 0
      %p222 = por %p220, %p221
      %s224 = sadd.s32 %s223, 1
      %p227 = scmp.eq.s32.totalorder %s30, 3
      %p228 = scmp.ne.s32.totalorder %s223, %s225
      %p229 = scmp.eq.s32.totalorder %s30, 0
      %p230 = por %p228, %p229
      %p231 = scmp.ne.s32.totalorder %s223, %s225
      %p232 = scmp.eq.s32.totalorder %s35, 3
      %p233 = por %p231, %p232
      %p234 = scmp.ne.s32.totalorder %s225, %s226
      %p235 = scmp.eq.s32.totalorder %s35, 0
      %p236 = por %p234, %p235
      %p237 = scmp.ne.s32.totalorder %s225, %s226
      %p238 = scmp.eq.s32.totalorder %s36, 3
      %p239 = por %p237, %p238
      %p241 = scmp.ne.s32.totalorder %s226, %s240
      %p242 = scmp.eq.s32.totalorder %s36, 0
      %p243 = por %p241, %p242
      %s245 = sadd.s32 %s244, 1
      %p248 = scmp.eq.s32.totalorder %s30, 3
      %p249 = scmp.ne.s32.totalorder %s244, %s246
      %p250 = scmp.eq.s32.totalorder %s30, 0
      %p251 = por %p249, %p250
      %p252 = scmp.ne.s32.totalorder %s244, %s246
      %p253 = scmp.eq.s32.totalorder %s35, 3
      %p254 = por %p252, %p253
      %p255 = scmp.ne.s32.totalorder %s246, %s247
      %p256 = scmp.eq.s32.totalorder %s35, 0
      %p257 = por %p255, %p256
      %p258 = scmp.ne.s32.totalorder %s246, %s247
      %p259 = scmp.eq.s32.totalorder %s36, 3
      %p260 = por %p258, %p259
      %p262 = scmp.ne.s32.totalorder %s247, %s261
      %p263 = scmp.eq.s32.totalorder %s36, 0
      %p264 = por %p262, %p263
      %s266 = sadd.s32 %s265, 1
      %p269 = scmp.eq.s32.totalorder %s30, 3
      %p270 = scmp.ne.s32.totalorder %s265, %s267
      %p271 = scmp.eq.s32.totalorder %s30, 0
      %p272 = por %p270, %p271
      %p273 = scmp.ne.s32.totalorder %s265, %s267
      %p274 = scmp.eq.s32.totalorder %s35, 3
      %p275 = por %p273, %p274
      %p276 = scmp.ne.s32.totalorder %s267, %s268
      %p277 = scmp.eq.s32.totalorder %s35, 0
      %p278 = por %p276, %p277
      %p279 = scmp.ne.s32.totalorder %s267, %s268
      %p280 = scmp.eq.s32.totalorder %s36, 3
      %p281 = por %p279, %p280
      %p283 = scmp.ne.s32.totalorder %s268, %s282
      %p284 = scmp.eq.s32.totalorder %s36, 0
      %p285 = por %p283, %p284
      %s287 = sadd.s32 %s286, 1
      %p290 = scmp.eq.s32.totalorder %s30, 3
      %p291 = scmp.ne.s32.totalorder %s286, %s288
      %p292 = scmp.eq.s32.totalorder %s30, 0
      %p293 = por %p291, %p292
      %p294 = scmp.ne.s32.totalorder %s286, %s288
      %p295 = scmp.eq.s32.totalorder %s35, 3
      %p296 = por %p294, %p295
      %p297 = scmp.ne.s32.totalorder %s288, %s289
      %p298 = scmp.eq.s32.totalorder %s35, 0
      %p299 = por %p297, %p298
      %p300 = scmp.ne.s32.totalorder %s288, %s289
      %p301 = scmp.eq.s32.totalorder %s36, 3
      %p302 = por %p300, %p301
      %p304 = scmp.ne.s32.totalorder %s289, %s303
      %p305 = scmp.eq.s32.totalorder %s36, 0
      %p306 = por %p304, %p305
      %s308 = sadd.s32 %s307, 1
      %p311 = scmp.eq.s32.totalorder %s30, 3
      %p312 = scmp.ne.s32.totalorder %s307, %s309
      %p313 = scmp.eq.s32.totalorder %s30, 0
      %p314 = por %p312, %p313
      %p315 = scmp.ne.s32.totalorder %s307, %s309
      %p316 = scmp.eq.s32.totalorder %s35, 3
      %p317 = por %p315, %p316
      %p318 = scmp.ne.s32.totalorder %s309, %s310
      %p319 = scmp.eq.s32.totalorder %s35, 0
      %p320 = por %p318, %p319
      %p321 = scmp.ne.s32.totalorder %s309, %s310
      %p322 = scmp.eq.s32.totalorder %s36, 3
      %p323 = por %p321, %p322
      %p325 = scmp.ne.s32.totalorder %s310, %s324
      %p326 = scmp.eq.s32.totalorder %s36, 0
      %p327 = por %p325, %p326
      %s329 = sadd.s32 %s328, 1
      %p332 = scmp.eq.s32.totalorder %s30, 3
      %p333 = scmp.ne.s32.totalorder %s328, %s330
      %p334 = scmp.eq.s32.totalorder %s30, 0
      %p335 = por %p333, %p334
      %p336 = scmp.ne.s32.totalorder %s328, %s330
      %p337 = scmp.eq.s32.totalorder %s35, 3
      %p338 = por %p336, %p337
      %p339 = scmp.ne.s32.totalorder %s330, %s331
      %p340 = scmp.eq.s32.totalorder %s35, 0
      %p341 = por %p339, %p340
      %p342 = scmp.ne.s32.totalorder %s330, %s331
      %p343 = scmp.eq.s32.totalorder %s36, 3
      %p344 = por %p342, %p343
      %p346 = scmp.ne.s32.totalorder %s331, %s345
      %p347 = scmp.eq.s32.totalorder %s36, 0
      %p348 = por %p346, %p347
      %s350 = sadd.s32 %s349, 1
      %p353 = scmp.eq.s32.totalorder %s30, 3
      %p354 = scmp.ne.s32.totalorder %s349, %s351
      %p355 = scmp.eq.s32.totalorder %s30, 0
      %p356 = por %p354, %p355
      %p357 = scmp.ne.s32.totalorder %s349, %s351
      %p358 = scmp.eq.s32.totalorder %s35, 3
      %p359 = por %p357, %p358
      %p360 = scmp.ne.s32.totalorder %s351, %s352
      %p361 = scmp.eq.s32.totalorder %s35, 0
      %p362 = por %p360, %p361
      %p363 = scmp.ne.s32.totalorder %s351, %s352
      %p364 = scmp.eq.s32.totalorder %s36, 3
      %p365 = por %p363, %p364
      %p367 = scmp.ne.s32.totalorder %s352, %s366
      %p368 = scmp.eq.s32.totalorder %s36, 0
      %p369 = por %p367, %p368
      %s370 = ssub.s32 %s38, %s45
      %s371 = ssub.s32 %s37, %s49
      %s372 = sor.u32 %s370, %s371
      %p373 = scmp.eq.s32.totalorder %s372, 0
      %s375 = sadd.s32 %s374, 1
      %s376 = scalar_select %p373, %s374, %s375
      %p379 = pneg %p373
      %p380 = scmp.eq.s32.totalorder %s30, 3
      %p381 = por %p379, %p380
      %p382 = scmp.ne.s32.totalorder %s374, %s377
      %p383 = scmp.eq.s32.totalorder %s30, 0
      %p384 = por %p382, %p383
      %p385 = scmp.ne.s32.totalorder %s374, %s377
      %p386 = scmp.eq.s32.totalorder %s35, 3
      %p387 = por %p385, %p386
      %p388 = scmp.ne.s32.totalorder %s377, %s378
      %p389 = scmp.eq.s32.totalorder %s35, 0
      %p390 = por %p388, %p389
      %p391 = scmp.ne.s32.totalorder %s377, %s378
      %p392 = scmp.eq.s32.totalorder %s36, 3
      %p393 = por %p391, %p392
      %p395 = scmp.ne.s32.totalorder %s378, %s394
      %p396 = scmp.eq.s32.totalorder %s36, 0
      %p397 = por %p395, %p396
      %p398 = scmp.le.s32.totalorder 1, %s30
      %p399 = scmp.lt.s32.totalorder %s30, 5
      %p400 = pnand %p398, %p399
      %p401 = pneg %p400
      // Predicated region
      $region9: #{tpu_custom_call.1} parent=5 // pred_check
        _
      $region10: #{tpu_custom_call.1} parent=5 // pred_check_branch
        %403 = sbr.rel (%p400) target = $region12
      $region11: #{tpu_custom_call.1} parent=5 // pred_region
        %s404 = ssub.s32 %s30, 1
        // Predicated region
        $region13: #{tpu_custom_call.1} parent=11 // pred_check
          %p405 = pneg %p89
        $region14: #{tpu_custom_call.1} parent=11 // pred_check_branch
          %407 = sbr.rel (%p405) target = $region16
        $region15: #{tpu_custom_call.1} parent=11 // pred_region
          %s409 = ssub.s32 1024, 1024
          %410 = vsyncadd [#allocation9], %s409
          %s411 = sshll.u32 [#allocation8], 4
          %s412 = int_to_ptr.vmem [resolvable:$true] %s411
          %417 = dma.hbm_to_vmem [thread:$0]  %s1, 1024, %s412, [#allocation9], 64, 64, 4
        $region16: #{tpu_custom_call.1} parent=11 // pred_fallthru
          _
        // Predicated region
        $region17: #{tpu_custom_call.1} parent=11 // pred_check
          %p418 = pneg %p110
        $region18: #{tpu_custom_call.1} parent=11 // pred_check_branch
          %420 = sbr.rel (%p418) target = $region20
        $region19: #{tpu_custom_call.1} parent=11 // pred_region
          _
        $region20: #{tpu_custom_call.1} parent=11 // pred_fallthru
          _
        // Predicated region
        $region21: #{tpu_custom_call.1} parent=11 // pred_check
          %p421 = pneg %p131
        $region22: #{tpu_custom_call.1} parent=11 // pred_check_branch
          %423 = sbr.rel (%p421) target = $region24
        $region23: #{tpu_custom_call.1} parent=11 // pred_region
          %s425 = ssub.s32 2048, 2048
          %426 = vsyncadd [#allocation9], %s425
          %s427 = sshll.u32 [#allocation10], 4
          %s428 = int_to_ptr.vmem [resolvable:$true] %s427
          %433 = dma.hbm_to_vmem [thread:$0]  %s3, 2048, %s428, [#allocation9], 128, 128, 8
        $region24: #{tpu_custom_call.1} parent=11 // pred_fallthru
          _
        // Predicated region
        $region25: #{tpu_custom_call.1} parent=11 // pred_check
          %p434 = pneg %p152
        $region26: #{tpu_custom_call.1} parent=11 // pred_check_branch
          %436 = sbr.rel (%p434) target = $region28
        $region27: #{tpu_custom_call.1} parent=11 // pred_region
          _
        $region28: #{tpu_custom_call.1} parent=11 // pred_fallthru
          _
        // Predicated region
        $region29: #{tpu_custom_call.1} parent=11 // pred_check
          %p437 = pneg %p173
        $region30: #{tpu_custom_call.1} parent=11 // pred_check_branch
          %439 = sbr.rel (%p437) target = $region32
        $region31: #{tpu_custom_call.1} parent=11 // pred_region
          %s441 = ssub.s32 1024, 1024
          %442 = vsyncadd [#allocation12], %s441
          %s443 = sshll.u32 [#allocation11], 4
          %s444 = int_to_ptr.vmem [resolvable:$true] %s443
          %449 = dma.hbm_to_vmem [thread:$0]  %s5, 1024, %s444, [#allocation12], 64, 64, 4
        $region32: #{tpu_custom_call.1} parent=11 // pred_fallthru
          _
        // Predicated region
        $region33: #{tpu_custom_call.1} parent=11 // pred_check
          %p450 = pneg %p194
        $region34: #{tpu_custom_call.1} parent=11 // pred_check_branch
          %452 = sbr.rel (%p450) target = $region36
        $region35: #{tpu_custom_call.1} parent=11 // pred_region
          _
        $region36: #{tpu_custom_call.1} parent=11 // pred_fallthru
          _
        // Predicated region
        $region37: #{tpu_custom_call.1} parent=11 // pred_check
          %p453 = pneg %p215
        $region38: #{tpu_custom_call.1} parent=11 // pred_check_branch
          %455 = sbr.rel (%p453) target = $region40
        $region39: #{tpu_custom_call.1} parent=11 // pred_region
          _
        $region40: #{tpu_custom_call.1} parent=11 // pred_fallthru
          _
        // Predicated region
        $region41: #{tpu_custom_call.1} parent=11 // pred_check
          %p456 = pneg %p236
        $region42: #{tpu_custom_call.1} parent=11 // pred_check_branch
          %458 = sbr.rel (%p456) target = $region44
        $region43: #{tpu_custom_call.1} parent=11 // pred_region
          _
        $region44: #{tpu_custom_call.1} parent=11 // pred_fallthru
          _
        // Predicated region
        $region45: #{tpu_custom_call.1} parent=11 // pred_check
          %p459 = pneg %p257
        $region46: #{tpu_custom_call.1} parent=11 // pred_check_branch
          %461 = sbr.rel (%p459) target = $region48
        $region47: #{tpu_custom_call.1} parent=11 // pred_region
          _
        $region48: #{tpu_custom_call.1} parent=11 // pred_fallthru
          _
        // Predicated region
        $region49: #{tpu_custom_call.1} parent=11 // pred_check
          %p462 = pneg %p278
        $region50: #{tpu_custom_call.1} parent=11 // pred_check_branch
          %464 = sbr.rel (%p462) target = $region52
        $region51: #{tpu_custom_call.1} parent=11 // pred_region
          _
        $region52: #{tpu_custom_call.1} parent=11 // pred_fallthru
          _
        // Predicated region
        $region53: #{tpu_custom_call.1} parent=11 // pred_check
          %p465 = pneg %p299
        $region54: #{tpu_custom_call.1} parent=11 // pred_check_branch
          %467 = sbr.rel (%p465) target = $region56
        $region55: #{tpu_custom_call.1} parent=11 // pred_region
          %s469 = ssub.s32 4096, 4096
          %470 = vsyncadd [#allocation12], %s469
          %s471 = sshll.u32 [#allocation13], 4
          %s472 = int_to_ptr.vmem [resolvable:$true] %s471
          %477 = dma.hbm_to_vmem [thread:$0]  %s11, 4096, %s472, [#allocation12], 256, 256, 16
        $region56: #{tpu_custom_call.1} parent=11 // pred_fallthru
          _
        // Predicated region
        $region57: #{tpu_custom_call.1} parent=11 // pred_check
          %p478 = pneg %p320
        $region58: #{tpu_custom_call.1} parent=11 // pred_check_branch
          %480 = sbr.rel (%p478) target = $region60
        $region59: #{tpu_custom_call.1} parent=11 // pred_region
          _
        $region60: #{tpu_custom_call.1} parent=11 // pred_fallthru
          _
        // Predicated region
        $region61: #{tpu_custom_call.1} parent=11 // pred_check
          %p481 = pneg %p341
        $region62: #{tpu_custom_call.1} parent=11 // pred_check_branch
          %483 = sbr.rel (%p481) target = $region64
        $region63: #{tpu_custom_call.1} parent=11 // pred_region
          %s485 = ssub.s32 4096, 4096
          %486 = vsyncadd [#allocation15], %s485
          %s487 = sshll.u32 [#allocation14], 4
          %s488 = int_to_ptr.vmem [resolvable:$true] %s487
          %493 = dma.hbm_to_vmem [thread:$0]  %s13, 4096, %s488, [#allocation15], 64, 64, 4
        $region64: #{tpu_custom_call.1} parent=11 // pred_fallthru
          _
        // Predicated region
        $region65: #{tpu_custom_call.1} parent=11 // pred_check
          %p494 = pneg %p362
        $region66: #{tpu_custom_call.1} parent=11 // pred_check_branch
          %496 = sbr.rel (%p494) target = $region68
        $region67: #{tpu_custom_call.1} parent=11 // pred_region
          _
        $region68: #{tpu_custom_call.1} parent=11 // pred_fallthru
          _
      $region12: #{tpu_custom_call.1} parent=5 // pred_fallthru
        _
      %p497 = scmp.lt.s32.totalorder %s30, 4
      // Predicated region
      $region69: #{tpu_custom_call.1} parent=5 // pred_check
        %p498 = pneg %p497
      $region70: #{tpu_custom_call.1} parent=5 // pred_check_branch
        %500 = sbr.rel (%p498) target = $region72
      $region71: #{tpu_custom_call.1} parent=5 // pred_region
        // Predicated region
        $region73: #{tpu_custom_call.1} parent=71 // pred_check
          %p501 = pneg %p62
        $region74: #{tpu_custom_call.1} parent=71 // pred_check_branch
          %503 = sbr.rel (%p501) target = $region76
        $region75: #{tpu_custom_call.1} parent=71 // pred_region
          %s504 = sand.u32 %s52, 1
          %s505 = scalar_lea.sflag [#allocation6], %s504
          %s506 = sand.u32 %s52, 1
          %s507 = smul.addr %s506, 16
          %s508 = scalar_lea.vmem [#allocation5], %s507
          %s510 = ssub.s32 256, 256
          %511 = vsyncadd %s505, %s510
          %s512 = smul.addr %s37, 128
          %s513 = scalar_lea.hbm %s0, %s512
          %s514 = sshll.u32 %s508, 4
          %s515 = int_to_ptr.vmem [resolvable:$true] %s514
          %520 = dma.hbm_to_vmem [thread:$0]  %s513, 256, %s515, %s505, 256, 128, 8
        $region76: #{tpu_custom_call.1} parent=71 // pred_fallthru
          _
      $region72: #{tpu_custom_call.1} parent=5 // pred_fallthru
        _
      %p521 = scmp.le.s32.totalorder 1, %s30
      %p522 = scmp.lt.s32.totalorder %s30, 5
      %p523 = pnand %p521, %p522
      %p524 = pneg %p523
      // Predicated region
      $region77: #{tpu_custom_call.1} parent=5 // pred_check
        _
      $region78: #{tpu_custom_call.1} parent=5 // pred_check_branch
        %526 = sbr.rel (%p523) target = $region80
      $region79: #{tpu_custom_call.1} parent=5 // pred_region
        %s527 = ssub.s32 %s30, 1
        %s528 = sand.u32 %s55, 1
        %s529 = scalar_lea.sflag [#allocation6], %s528
        %s530 = sand.u32 %s55, 1
        %s531 = smul.addr %s530, 16
        %s532 = scalar_lea.vmem [#allocation5], %s531
        // Predicated region
        $region81: #{tpu_custom_call.1} parent=79 // pred_check
          %p533 = pneg %p68
        $region82: #{tpu_custom_call.1} parent=79 // pred_check_branch
          %535 = sbr.rel (%p533) target = $region84
        $region83: #{tpu_custom_call.1} parent=79 // pred_region
          %536 = dma.done %s529, 256
        $region84: #{tpu_custom_call.1} parent=79 // pred_fallthru
          _
        // Predicated region
        $region85: #{tpu_custom_call.1} parent=79 // pred_check
          %p537 = pneg %p89
        $region86: #{tpu_custom_call.1} parent=79 // pred_check_branch
          %539 = sbr.rel (%p537) target = $region88
        $region87: #{tpu_custom_call.1} parent=79 // pred_region
          %540 = dma.done [#allocation9], 1024
        $region88: #{tpu_custom_call.1} parent=79 // pred_fallthru
          _
        // Predicated region
        $region89: #{tpu_custom_call.1} parent=79 // pred_check
          %p541 = pneg %p131
        $region90: #{tpu_custom_call.1} parent=79 // pred_check_branch
          %543 = sbr.rel (%p541) target = $region92
        $region91: #{tpu_custom_call.1} parent=79 // pred_region
          %544 = dma.done [#allocation9], 2048
        $region92: #{tpu_custom_call.1} parent=79 // pred_fallthru
          _
        // Predicated region
        $region93: #{tpu_custom_call.1} parent=79 // pred_check
          %p545 = pneg %p173
        $region94: #{tpu_custom_call.1} parent=79 // pred_check_branch
          %547 = sbr.rel (%p545) target = $region96
        $region95: #{tpu_custom_call.1} parent=79 // pred_region
          %548 = dma.done [#allocation12], 1024
        $region96: #{tpu_custom_call.1} parent=79 // pred_fallthru
          _
        // Predicated region
        $region97: #{tpu_custom_call.1} parent=79 // pred_check
          %p549 = pneg %p299
        $region98: #{tpu_custom_call.1} parent=79 // pred_check_branch
          %551 = sbr.rel (%p549) target = $region100
        $region99: #{tpu_custom_call.1} parent=79 // pred_region
          %552 = dma.done [#allocation12], 4096
        $region100: #{tpu_custom_call.1} parent=79 // pred_fallthru
          _
        // Predicated region
        $region101: #{tpu_custom_call.1} parent=79 // pred_check
          %p553 = pneg %p341
        $region102: #{tpu_custom_call.1} parent=79 // pred_check_branch
          %555 = sbr.rel (%p553) target = $region104
        $region103: #{tpu_custom_call.1} parent=79 // pred_region
          %556 = dma.done [#allocation15], 4096
        $region104: #{tpu_custom_call.1} parent=79 // pred_fallthru
          _
        %s557 = sand.u32 %s55, 1
        %s558 = scalar_lea.sflag [#allocation6], %s557
        %s559 = sand.u32 %s55, 1
        %s560 = smul.addr %s559, 16
        %s561 = scalar_lea.vmem [#allocation5], %s560
        %p562 = pneg %p68
        %p563 = pneg %p65
        %p564 = pneg %p89
        %p565 = pneg %p86
        %p566 = pneg %p110
        %p567 = pneg %p107
        %p568 = pneg %p131
        %p569 = pneg %p128
        %p570 = pneg %p152
        %p571 = pneg %p149
        %p572 = pneg %p173
        %p573 = pneg %p170
        %p574 = pneg %p194
        %p575 = pneg %p191
        %p576 = pneg %p215
        %p577 = pneg %p212
        %p578 = pneg %p236
        %p579 = pneg %p233
        %p580 = pneg %p257
        %p581 = pneg %p254
        %p582 = pneg %p278
        %p583 = pneg %p275
        %p584 = pneg %p299
        %p585 = pneg %p296
        %p586 = pneg %p320
        %p587 = pneg %p317
        %p588 = pneg %p341
        %p589 = pneg %p338
        %p590 = pneg %p362
        %p591 = pneg %p359
        %p592 = pneg %p390
        %p593 = pneg %p387
        %s594 = sand.u32 %s377, 1
        %s595 = scalar_lea.sflag [#allocation7], %s594
        %s596 = sand.u32 %s377, 1
        %s597 = smul.addr %s596, 8
        %s598 = scalar_lea.vmem [#allocation16], %s597
        %p600 = scmp.eq.s32.totalorder %s40, 0
        // Predicated region
        $region105: #{tpu_custom_call.1} parent=79 // pred_check
          %p601 = pneg %p600
        $region106: #{tpu_custom_call.1} parent=79 // pred_check_branch
          %603 = sbr.rel (%p601) target = $region108
        $region107: #{tpu_custom_call.1} parent=79 // pred_region
          %v604 = vld [vmem:[%s532] sm:$0xff]
          %v605 = vld [vmem:[%s532 + $0x8] sm:$0xff]
          %606 = vadd.xlane.f32.xlu0 %v604
          %v607 = vpop.xlane.xlu0 %606
          %608 = vadd.xlane.f32.xlu0 %v605
          %v609 = vpop.xlane.xlu0 %608
          %v610 = vrcp.pop 128.0
          %v611 = vmul.f32 %v607, %v610
          %v612 = vmul.f32 %v609, %v610
          %v613 = vsub.f32 %v604, %v611
          %v614 = vsub.f32 %v605, %v612
          %v615 = vmul.f32 %v613, %v613
          %v616 = vmul.f32 %v614, %v614
          %617 = vadd.xlane.f32.xlu0 %v615
          %v618 = vpop.xlane.xlu0 %617
          %619 = vadd.xlane.f32.xlu0 %v616
          %v620 = vpop.xlane.xlu0 %619
          %v621 = vmul.f32 %v618, %v610
          %v622 = vmul.f32 %v620, %v610
          %v623 = vadd.f32 %v621, 1e-05
          %v624 = vadd.f32 %v622, 1e-05
          %v625 = vrsqrt.pop %v623
          %v626 = vrsqrt.pop %v624
          %v627 = vmul.f32 %v613, %v625
          %v628 = vmul.f32 %v614, %v626
          %v629 = vld [vmem:[%s7] sm:$0x1]
          %v631 = vlaneseq
          %v632 = vshrl.u32 %v631, 7
          %v633 = vsub.s32 0, %v632
          %v634 = vrot.slane %v629, %v633
          %v636 = vmul.f32 %v627, %v634
          %v637 = vmul.f32 %v628, %v634
          %v638 = vld [vmem:[%s8] sm:$0x1]
          %v640 = vlaneseq
          %v641 = vshrl.u32 %v640, 7
          %v642 = vsub.s32 0, %v641
          %v643 = vrot.slane %v638, %v642
          %v645 = vadd.f32 %v636, %v643
          %v646 = vadd.f32 %v637, %v643
          %v647 = vpack.c.bf16 %v646, %v645
          %v648 = vld [vmem:[#allocation10] sm:$0xff]
          %v649 = vld [vmem:[#allocation10 + $0x8] sm:$0xff]
          %v650 = vld [vmem:[#allocation10 + $0x10] sm:$0xff]
          %v651 = vld [vmem:[#allocation10 + $0x18] sm:$0xff]
          %v652 = vld [vmem:[#allocation10 + $0x20] sm:$0xff]
          %v653 = vld [vmem:[#allocation10 + $0x28] sm:$0xff]
          %v654 = vld [vmem:[#allocation10 + $0x30] sm:$0xff]
          %v655 = vld [vmem:[#allocation10 + $0x38] sm:$0xff]
          %v656 = vld [vmem:[#allocation10 + $0x40] sm:$0xff]
          %v657 = vld [vmem:[#allocation10 + $0x48] sm:$0xff]
          %v658 = vld [vmem:[#allocation10 + $0x50] sm:$0xff]
          %v659 = vld [vmem:[#allocation10 + $0x58] sm:$0xff]
          %v660 = vld [vmem:[#allocation10 + $0x60] sm:$0xff]
          %v661 = vld [vmem:[#allocation10 + $0x68] sm:$0xff]
          %v662 = vld [vmem:[#allocation10 + $0x70] sm:$0xff]
          %v663 = vld [vmem:[#allocation10 + $0x78] sm:$0xff]
          %v664 = vld [vmem:[%s4] sm:$0x3]
          %v666 = vlaneseq
          %v667 = vshrl.u32 %v666, 7
          %v668 = vsub.s32 0, %v667
          %v669 = vrot.slane %v664, %v668
          %v670 = vlaneseq
          %v671 = vshrl.u32 %v670, 7
          %v672 = vsub.s32 1, %v671
          %v673 = vrot.slane %v664, %v672
          %v692 = vunpack.c.l.b16 %v648
          %v693 = vunpack.c.h.b16 %v648
          %v694 = vunpack.c.l.b16 %v649
          %v695 = vunpack.c.h.b16 %v649
          %v696 = vunpack.c.l.b16 %v650
          %v697 = vunpack.c.h.b16 %v650
          %v698 = vunpack.c.l.b16 %v651
          %v699 = vunpack.c.h.b16 %v651
          %v700 = vunpack.c.l.b16 %v652
          %v701 = vunpack.c.h.b16 %v652
          %v702 = vunpack.c.l.b16 %v653
          %v703 = vunpack.c.h.b16 %v653
          %v704 = vunpack.c.l.b16 %v654
          %v705 = vunpack.c.h.b16 %v654
          %v706 = vunpack.c.l.b16 %v655
          %v707 = vunpack.c.h.b16 %v655
          %v708 = vunpack.c.l.b16 %v656
          %v709 = vunpack.c.h.b16 %v656
          %v710 = vunpack.c.l.b16 %v657
          %v711 = vunpack.c.h.b16 %v657
          %v712 = vunpack.c.l.b16 %v658
          %v713 = vunpack.c.h.b16 %v658
          %v714 = vunpack.c.l.b16 %v659
          %v715 = vunpack.c.h.b16 %v659
          %v716 = vunpack.c.l.b16 %v660
          %v717 = vunpack.c.h.b16 %v660
          %v718 = vunpack.c.l.b16 %v661
          %v719 = vunpack.c.h.b16 %v661
          %v720 = vunpack.c.l.b16 %v662
          %v721 = vunpack.c.h.b16 %v662
          %v722 = vunpack.c.l.b16 %v663
          %v723 = vunpack.c.h.b16 %v663
          %v724 = vpack.c.b16 %v694, %v692
          %v725 = vpack.c.b16 %v695, %v693
          %v726 = vpack.c.b16 %v698, %v696
          %v727 = vpack.c.b16 %v699, %v697
          %v728 = vpack.c.b16 %v702, %v700
          %v729 = vpack.c.b16 %v703, %v701
          %v730 = vpack.c.b16 %v706, %v704
          %v731 = vpack.c.b16 %v707, %v705
          %v732 = vpack.c.b16 %v710, %v708
          %v733 = vpack.c.b16 %v711, %v709
          %v734 = vpack.c.b16 %v714, %v712
          %v735 = vpack.c.b16 %v715, %v713
          %v736 = vpack.c.b16 %v718, %v716
          %v737 = vpack.c.b16 %v719, %v717
          %v738 = vpack.c.b16 %v722, %v720
          %v739 = vpack.c.b16 %v723, %v721
          %756 = vmatprep.subr.bf16.mxu0 %v725
          %757 = vmatpush1.bf16.msra.mxu0 %v724
          %758 = vmatprep.subr.bf16.mxu0 %v727
          %759 = vmatpush1.bf16.msra.mxu0 %v726
          %760 = vmatprep.subr.bf16.mxu0 %v729
          %761 = vmatpush1.bf16.msra.mxu0 %v728
          %762 = vmatprep.subr.bf16.mxu0 %v731
          %763 = vmatpush1.bf16.msra.mxu0 %v730
          %764 = vmatprep.subr.bf16.mxu0 %v733
          %765 = vmatpush1.bf16.msra.mxu0 %v732
          %766 = vmatprep.subr.bf16.mxu0 %v735
          %767 = vmatpush1.bf16.msra.mxu0 %v734
          %768 = vmatprep.subr.bf16.mxu0 %v737
          %769 = vmatpush1.bf16.msra.mxu0 %v736
          %770 = vmatprep.subr.bf16.mxu0 %v739
          %771 = vmatpush1.bf16.msra.mxu0 %v738
          %772 = vmatprep.subr.bf16.mxu0 0
          %773 = vmatpush1.bf16.msra.mxu0 0
          %774 = vmatprep.subr.bf16.mxu0 0
          %775 = vmatpush1.bf16.msra.mxu0 0
          %776 = vmatprep.subr.bf16.mxu0 0
          %777 = vmatpush1.bf16.msra.mxu0 0
          %778 = vmatprep.subr.bf16.mxu0 0
          %779 = vmatpush1.bf16.msra.mxu0 0
          %780 = vmatprep.subr.bf16.mxu0 0
          %781 = vmatpush1.bf16.msra.mxu0 0
          %782 = vmatprep.subr.bf16.mxu0 0
          %783 = vmatpush1.bf16.msra.mxu0 0
          %784 = vmatprep.subr.bf16.mxu0 0
          %785 = vmatpush1.bf16.msra.mxu0 0
          %786 = vmatprep.subr.bf16.mxu0 0
          %787 = vmatpush1.bf16.msra.mxu0 0
          %788 = vmatprep.mubr.bf16.mxu0 0
          %789 = vmatmul.mubr.bf16.gmra.mrb[0].mxu0 %v647
          %v790 = vpop.f32.mrb[0].mxu0
          %v791 = vadd.f32 %v669, %v790
          %v792 = vpop.f32.mrb[0].mxu0
          %v793 = vadd.f32 %v673, %v792
          %v794 = vpop.f32.mrb[0].mxu0
          %v795 = vadd.f32 %v669, %v794
          %v796 = vpop.f32.mrb[0].mxu0
          %v797 = vadd.f32 %v673, %v796
          %798 = vdwg.mxu0
          %v799 = vpack.c.bf16 %v795, %v791
          %v800 = vpack.c.bf16 %v797, %v793
          %vm801 = vcmask 261120
          %802 = vst.msk [vmem:[#allocation2] sm:$0xff] %vm801, %v799
          %803 = vst.msk [vmem:[#allocation3] sm:$0xff] %vm801, %v800
          %805 = vrot.lane.b32.xlu0 %v799, 96
          %v806 = vpop.permute.xlu0 %805
          %s808 = scalar_lea.vmem [#allocation2], 8
          %809 = vst.msk [vmem:[%s808] sm:$0xff] %vm801, %v806
          %811 = vrot.lane.b32.xlu0 %v800, 96
          %v812 = vpop.permute.xlu0 %811
          %s814 = scalar_lea.vmem [#allocation3], 8
          %815 = vst.msk [vmem:[%s814] sm:$0xff] %vm801, %v812
          %816 = vrot.lane.b32.xlu0 %v799, 64
          %v817 = vpop.permute.xlu0 %816
          %s819 = scalar_lea.vmem [#allocation2], 16
          %820 = vst.msk [vmem:[%s819] sm:$0xff] %vm801, %v817
          %821 = vrot.lane.b32.xlu0 %v800, 64
          %v822 = vpop.permute.xlu0 %821
          %s824 = scalar_lea.vmem [#allocation3], 16
          %825 = vst.msk [vmem:[%s824] sm:$0xff] %vm801, %v822
          %826 = vrot.lane.b32.xlu0 %v799, 32
          %v827 = vpop.permute.xlu0 %826
          %s829 = scalar_lea.vmem [#allocation2], 24
          %830 = vst.msk [vmem:[%s829] sm:$0xff] %vm801, %v827
          %831 = vrot.lane.b32.xlu0 %v800, 32
          %v832 = vpop.permute.xlu0 %831
          %s834 = scalar_lea.vmem [#allocation3], 24
          %835 = vst.msk [vmem:[%s834] sm:$0xff] %vm801, %v832
        $region108: #{tpu_custom_call.1} parent=79 // pred_fallthru
          _
        %s836 = smul.u32 %s40, 8
        %s837 = scalar_lea.vmem %s532, %s836 [#allocation5]
        %v838 = vld [vmem:[%s837] sm:$0xff]
        %839 = vadd.xlane.f32.xlu0 %v838
        %v840 = vpop.xlane.xlu0 %839
        %v841 = vrcp.pop 128.0
        %v842 = vmul.f32 %v840, %v841
        %v843 = vsub.f32 %v838, %v842
        %v844 = vmul.f32 %v843, %v843
        %845 = vadd.xlane.f32.xlu0 %v844
        %v846 = vpop.xlane.xlu0 %845
        %v847 = vmul.f32 %v846, %v841
        %v848 = vadd.f32 %v847, 1e-05
        %v849 = vrsqrt.pop %v848
        %v850 = vmul.f32 %v843, %v849
        %v851 = vld [vmem:[%s7] sm:$0x1]
        %v853 = vlaneseq
        %v854 = vshrl.u32 %v853, 7
        %v855 = vsub.s32 0, %v854
        %v856 = vrot.slane %v851, %v855
        %v858 = vmul.f32 %v850, %v856
        %v859 = vld [vmem:[%s8] sm:$0x1]
        %v861 = vlaneseq
        %v862 = vshrl.u32 %v861, 7
        %v863 = vsub.s32 0, %v862
        %v864 = vrot.slane %v859, %v863
        %v866 = vadd.f32 %v858, %v864
        %v867 = vpack.c.bf16 %v866, %v866
        %v868 = vld [vmem:[#allocation8] sm:$0xf]
        %v869 = vld [vmem:[#allocation8 + $0x4] sm:$0xf]
        %v870 = vld [vmem:[#allocation8 + $0x8] sm:$0xf]
        %v871 = vld [vmem:[#allocation8 + $0xc] sm:$0xf]
        %v872 = vld [vmem:[#allocation8 + $0x10] sm:$0xf]
        %v873 = vld [vmem:[#allocation8 + $0x14] sm:$0xf]
        %v874 = vld [vmem:[#allocation8 + $0x18] sm:$0xf]
        %v875 = vld [vmem:[#allocation8 + $0x1c] sm:$0xf]
        %v876 = vld [vmem:[#allocation8 + $0x20] sm:$0xf]
        %v877 = vld [vmem:[#allocation8 + $0x24] sm:$0xf]
        %v878 = vld [vmem:[#allocation8 + $0x28] sm:$0xf]
        %v879 = vld [vmem:[#allocation8 + $0x2c] sm:$0xf]
        %v880 = vld [vmem:[#allocation8 + $0x30] sm:$0xf]
        %v881 = vld [vmem:[#allocation8 + $0x34] sm:$0xf]
        %v882 = vld [vmem:[#allocation8 + $0x38] sm:$0xf]
        %v883 = vld [vmem:[#allocation8 + $0x3c] sm:$0xf]
        %v884 = vld [vmem:[%s2] sm:$0x1]
        %v886 = vlaneseq
        %v887 = vshrl.u32 %v886, 7
        %v888 = vsub.s32 0, %v887
        %v889 = vrot.slane %v884, %v888
        %v907 = vunpack.c.l.b16 %v868
        %v908 = vunpack.c.l.b16 %v869
        %v909 = vunpack.c.l.b16 %v870
        %v910 = vunpack.c.l.b16 %v871
        %v911 = vunpack.c.l.b16 %v872
        %v912 = vunpack.c.l.b16 %v873
        %v913 = vunpack.c.l.b16 %v874
        %v914 = vunpack.c.l.b16 %v875
        %v915 = vunpack.c.l.b16 %v876
        %v916 = vunpack.c.l.b16 %v877
        %v917 = vunpack.c.l.b16 %v878
        %v918 = vunpack.c.l.b16 %v879
        %v919 = vunpack.c.l.b16 %v880
        %v920 = vunpack.c.l.b16 %v881
        %v921 = vunpack.c.l.b16 %v882
        %v922 = vunpack.c.l.b16 %v883
        %v923 = vpack.c.b16 %v908, %v907
        %v924 = vpack.c.b16 %v910, %v909
        %v925 = vpack.c.b16 %v912, %v911
        %v926 = vpack.c.b16 %v914, %v913
        %v927 = vpack.c.b16 %v916, %v915
        %v928 = vpack.c.b16 %v918, %v917
        %v929 = vpack.c.b16 %v920, %v919
        %v930 = vpack.c.b16 %v922, %v921
        %939 = vmatprep.subr.bf16.mxu0 0
        %940 = vmatpush1.bf16.msra.mxu0 %v923
        %941 = vmatprep.subr.bf16.mxu0 0
        %942 = vmatpush1.bf16.msra.mxu0 %v924
        %943 = vmatprep.subr.bf16.mxu0 0
        %944 = vmatpush1.bf16.msra.mxu0 %v925
        %945 = vmatprep.subr.bf16.mxu0 0
        %946 = vmatpush1.bf16.msra.mxu0 %v926
        %947 = vmatprep.subr.bf16.mxu0 0
        %948 = vmatpush1.bf16.msra.mxu0 %v927
        %949 = vmatprep.subr.bf16.mxu0 0
        %950 = vmatpush1.bf16.msra.mxu0 %v928
        %951 = vmatprep.subr.bf16.mxu0 0
        %952 = vmatpush1.bf16.msra.mxu0 %v929
        %953 = vmatprep.subr.bf16.mxu0 0
        %954 = vmatpush1.bf16.msra.mxu0 %v930
        %955 = vmatprep.subr.bf16.mxu0 0
        %956 = vmatpush1.bf16.msra.mxu0 0
        %957 = vmatprep.subr.bf16.mxu0 0
        %958 = vmatpush1.bf16.msra.mxu0 0
        %959 = vmatprep.subr.bf16.mxu0 0
        %960 = vmatpush1.bf16.msra.mxu0 0
        %961 = vmatprep.subr.bf16.mxu0 0
        %962 = vmatpush1.bf16.msra.mxu0 0
        %963 = vmatprep.subr.bf16.mxu0 0
        %964 = vmatpush1.bf16.msra.mxu0 0
        %965 = vmatprep.subr.bf16.mxu0 0
        %966 = vmatpush1.bf16.msra.mxu0 0
        %967 = vmatprep.subr.bf16.mxu0 0
        %968 = vmatpush1.bf16.msra.mxu0 0
        %969 = vmatprep.subr.bf16.mxu0 0
        %970 = vmatpush1.bf16.msra.mxu0 0
        %971 = vmatprep.mubr.bf16.mxu0 0
        %972 = vmatmul.mubr.bf16.gmra.mrb[0].mxu0 %v867
        %v973 = vpop.f32.mrb[0].mxu0
        %v974 = vadd.f32 %v889, %v973
        %v975 = vpop.f32.mrb[0].mxu0
        %v976 = vpop.f32.mrb[0].mxu0
        %v977 = vpop.f32.mrb[0].mxu0
        %978 = vdwg.mxu0
        %v979 = vpack.c.bf16 %v974, %v974
        %vm980 = vcmask 257024
        %981 = vst.msk [vmem:[#allocation4] sm:$0xf] %vm980, %v979
        %v983 = vunpack.c.l.b16 %v979
        %v984 = vpack.c.b16 %v983, %v983
        %985 = vrot.lane.b32.xlu0 %v984, 96
        %v986 = vpop.permute.xlu0 %985
        %s988 = scalar_lea.vmem [#allocation4], 4
        %989 = vst.msk [vmem:[%s988] sm:$0xf] %vm980, %v986
        %990 = vrot.lane.b32.xlu0 %v984, 64
        %v991 = vpop.permute.xlu0 %990
        %s993 = scalar_lea.vmem [#allocation4], 8
        %994 = vst.msk [vmem:[%s993] sm:$0xf] %vm980, %v991
        %995 = vrot.lane.b32.xlu0 %v984, 32
        %v996 = vpop.permute.xlu0 %995
        %s998 = scalar_lea.vmem [#allocation4], 12
        %999 = vst.msk [vmem:[%s998] sm:$0xf] %vm980, %v996
        %v1000 = vld [vmem:[#allocation4] sm:$0xf]
        %v1001 = vld [vmem:[#allocation4 + $0x4] sm:$0xf]
        %v1002 = vld [vmem:[#allocation4 + $0x8] sm:$0xf]
        %v1003 = vld [vmem:[#allocation4 + $0xc] sm:$0xf]
        %v1004 = vld [vmem:[#allocation2] sm:$0xff]
        %v1005 = vld [vmem:[#allocation2 + $0x8] sm:$0xff]
        %v1006 = vld [vmem:[#allocation2 + $0x10] sm:$0xff]
        %v1007 = vld [vmem:[#allocation2 + $0x18] sm:$0xff]
        %v1008 = vld [vmem:[#allocation3] sm:$0xff]
        %v1009 = vld [vmem:[#allocation3 + $0x8] sm:$0xff]
        %v1010 = vld [vmem:[#allocation3 + $0x10] sm:$0xff]
        %v1011 = vld [vmem:[#allocation3 + $0x18] sm:$0xff]
        %vm1012 = vcmask 261120
        %v1014 = vsel %vm1012, %v1000, 0
        %v1017 = vsel %vm1012, %v1004, 0
        %1019 = vmatprep.subr.bf16.mxu0 0
        %1020 = vmatpush1.bf16.xpose.msra.mxu0 %v1017
        %1021 = vmatprep.subr.bf16.mxu0 0
        %1022 = vmatpush1.bf16.xpose.msra.mxu0 0
        %1023 = vmatprep.subr.bf16.mxu0 0
        %1024 = vmatpush1.bf16.xpose.msra.mxu0 0
        %1025 = vmatprep.subr.bf16.mxu0 0
        %1026 = vmatpush1.bf16.xpose.msra.mxu0 0
        %1027 = vmatprep.subr.bf16.mxu0 0
        %1028 = vmatpush1.bf16.xpose.msra.mxu0 0
        %1029 = vmatprep.subr.bf16.mxu0 0
        %1030 = vmatpush1.bf16.xpose.msra.mxu0 0
        %1031 = vmatprep.subr.bf16.mxu0 0
        %1032 = vmatpush1.bf16.xpose.msra.mxu0 0
        %1033 = vmatprep.subr.bf16.mxu0 0
        %1034 = vmatpush1.bf16.xpose.msra.mxu0 0
        %1035 = vmatprep.subr.bf16.mxu0 0
        %1036 = vmatpush1.bf16.xpose.msra.mxu0 0
        %1037 = vmatprep.subr.bf16.mxu0 0
        %1038 = vmatpush1.bf16.xpose.msra.mxu0 0
        %1039 = vmatprep.subr.bf16.mxu0 0
        %1040 = vmatpush1.bf16.xpose.msra.mxu0 0
        %1041 = vmatprep.subr.bf16.mxu0 0
        %1042 = vmatpush1.bf16.xpose.msra.mxu0 0
        %1043 = vmatprep.subr.bf16.mxu0 0
        %1044 = vmatpush1.bf16.xpose.msra.mxu0 0
        %1045 = vmatprep.subr.bf16.mxu0 0
        %1046 = vmatpush1.bf16.xpose.msra.mxu0 0
        %1047 = vmatprep.subr.bf16.mxu0 0
        %1048 = vmatpush1.bf16.xpose.msra.mxu0 0
        %1049 = vmatprep.subr.bf16.mxu0 0
        %1050 = vmatpush1.bf16.xpose.msra.mxu0 0
        %1051 = vmatprep.mubr.bf16.mxu0 0
        %1052 = vmatmul.mubr.bf16.gmra.mrb[0].mxu0 %v1014
        %v1053 = vpop.f32.mrb[0].mxu0
        %v1054 = vadd.f32 0.0, %v1053
        %v1055 = vpop.f32.mrb[0].mxu0
        %v1056 = vpop.f32.mrb[0].mxu0
        %v1057 = vpop.f32.mrb[0].mxu0
        %1058 = vdwg.mxu0
        %v1060 = vsel %vm1012, %v1001, 0
        %v1063 = vsel %vm1012, %v1005, 0
        %1065 = vmatprep.subr.bf16.mxu0 0
        %1066 = vmatpush1.bf16.xpose.msra.mxu0 %v1063
        %1067 = vmatprep.subr.bf16.mxu0 0
        %1068 = vmatpush1.bf16.xpose.msra.mxu0 0
        %1069 = vmatprep.subr.bf16.mxu0 0
        %1070 = vmatpush1.bf16.xpose.msra.mxu0 0
        %1071 = vmatprep.subr.bf16.mxu0 0
        %1072 = vmatpush1.bf16.xpose.msra.mxu0 0
        %1073 = vmatprep.subr.bf16.mxu0 0
        %1074 = vmatpush1.bf16.xpose.msra.mxu0 0
        %1075 = vmatprep.subr.bf16.mxu0 0
        %1076 = vmatpush1.bf16.xpose.msra.mxu0 0
        %1077 = vmatprep.subr.bf16.mxu0 0
        %1078 = vmatpush1.bf16.xpose.msra.mxu0 0
        %1079 = vmatprep.subr.bf16.mxu0 0
        %1080 = vmatpush1.bf16.xpose.msra.mxu0 0
        %1081 = vmatprep.subr.bf16.mxu0 0
        %1082 = vmatpush1.bf16.xpose.msra.mxu0 0
        %1083 = vmatprep.subr.bf16.mxu0 0
        %1084 = vmatpush1.bf16.xpose.msra.mxu0 0
        %1085 = vmatprep.subr.bf16.mxu0 0
        %1086 = vmatpush1.bf16.xpose.msra.mxu0 0
        %1087 = vmatprep.subr.bf16.mxu0 0
        %1088 = vmatpush1.bf16.xpose.msra.mxu0 0
        %1089 = vmatprep.subr.bf16.mxu0 0
        %1090 = vmatpush1.bf16.xpose.msra.mxu0 0
        %1091 = vmatprep.subr.bf16.mxu0 0
        %1092 = vmatpush1.bf16.xpose.msra.mxu0 0
        %1093 = vmatprep.subr.bf16.mxu0 0
        %1094 = vmatpush1.bf16.xpose.msra.mxu0 0
        %1095 = vmatprep.subr.bf16.mxu0 0
        %1096 = vmatpush1.bf16.xpose.msra.mxu0 0
        %1097 = vmatprep.mubr.bf16.mxu0 0
        %1098 = vmatmul.mubr.bf16.gmra.mrb[0].mxu0 %v1060
        %v1099 = vpop.f32.mrb[0].mxu0
        %v1100 = vadd.f32 0.0, %v1099
        %v1101 = vpop.f32.mrb[0].mxu0
        %v1102 = vpop.f32.mrb[0].mxu0
        %v1103 = vpop.f32.mrb[0].mxu0
        %1104 = vdwg.mxu0
        %v1106 = vsel %vm1012, %v1002, 0
        %v1109 = vsel %vm1012, %v1006, 0
        %1111 = vmatprep.subr.bf16.mxu0 0
        %1112 = vmatpush1.bf16.xpose.msra.mxu0 %v1109
        %1113 = vmatprep.subr.bf16.mxu0 0
        %1114 = vmatpush1.bf16.xpose.msra.mxu0 0
        %1115 = vmatprep.subr.bf16.mxu0 0
        %1116 = vmatpush1.bf16.xpose.msra.mxu0 0
        %1117 = vmatprep.subr.bf16.mxu0 0
        %1118 = vmatpush1.bf16.xpose.msra.mxu0 0
        %1119 = vmatprep.subr.bf16.mxu0 0
        %1120 = vmatpush1.bf16.xpose.msra.mxu0 0
        %1121 = vmatprep.subr.bf16.mxu0 0
        %1122 = vmatpush1.bf16.xpose.msra.mxu0 0
        %1123 = vmatprep.subr.bf16.mxu0 0
        %1124 = vmatpush1.bf16.xpose.msra.mxu0 0
        %1125 = vmatprep.subr.bf16.mxu0 0
        %1126 = vmatpush1.bf16.xpose.msra.mxu0 0
        %1127 = vmatprep.subr.bf16.mxu0 0
        %1128 = vmatpush1.bf16.xpose.msra.mxu0 0
        %1129 = vmatprep.subr.bf16.mxu0 0
        %1130 = vmatpush1.bf16.xpose.msra.mxu0 0
        %1131 = vmatprep.subr.bf16.mxu0 0
        %1132 = vmatpush1.bf16.xpose.msra.mxu0 0
        %1133 = vmatprep.subr.bf16.mxu0 0
        %1134 = vmatpush1.bf16.xpose.msra.mxu0 0
        %1135 = vmatprep.subr.bf16.mxu0 0
        %1136 = vmatpush1.bf16.xpose.msra.mxu0 0
        %1137 = vmatprep.subr.bf16.mxu0 0
        %1138 = vmatpush1.bf16.xpose.msra.mxu0 0
        %1139 = vmatprep.subr.bf16.mxu0 0
        %1140 = vmatpush1.bf16.xpose.msra.mxu0 0
        %1141 = vmatprep.subr.bf16.mxu0 0
        %1142 = vmatpush1.bf16.xpose.msra.mxu0 0
        %1143 = vmatprep.mubr.bf16.mxu0 0
        %1144 = vmatmul.mubr.bf16.gmra.mrb[0].mxu0 %v1106
        %v1145 = vpop.f32.mrb[0].mxu0
        %v1146 = vadd.f32 0.0, %v1145
        %v1147 = vpop.f32.mrb[0].mxu0
        %v1148 = vpop.f32.mrb[0].mxu0
        %v1149 = vpop.f32.mrb[0].mxu0
        %1150 = vdwg.mxu0
        %v1152 = vsel %vm1012, %v1003, 0
        %v1155 = vsel %vm1012, %v1007, 0
        %1157 = vmatprep.subr.bf16.mxu0 0
        %1158 = vmatpush1.bf16.xpose.msra.mxu0 %v1155
        %1159 = vmatprep.subr.bf16.mxu0 0
        %1160 = vmatpush1.bf16.xpose.msra.mxu0 0
        %1161 = vmatprep.subr.bf16.mxu0 0
        %1162 = vmatpush1.bf16.xpose.msra.mxu0 0
        %1163 = vmatprep.subr.bf16.mxu0 0
        %1164 = vmatpush1.bf16.xpose.msra.mxu0 0
        %1165 = vmatprep.subr.bf16.mxu0 0
        %1166 = vmatpush1.bf16.xpose.msra.mxu0 0
        %1167 = vmatprep.subr.bf16.mxu0 0
        %1168 = vmatpush1.bf16.xpose.msra.mxu0 0
        %1169 = vmatprep.subr.bf16.mxu0 0
        %1170 = vmatpush1.bf16.xpose.msra.mxu0 0
        %1171 = vmatprep.subr.bf16.mxu0 0
        %1172 = vmatpush1.bf16.xpose.msra.mxu0 0
        %1173 = vmatprep.subr.bf16.mxu0 0
        %1174 = vmatpush1.bf16.xpose.msra.mxu0 0
        %1175 = vmatprep.subr.bf16.mxu0 0
        %1176 = vmatpush1.bf16.xpose.msra.mxu0 0
        %1177 = vmatprep.subr.bf16.mxu0 0
        %1178 = vmatpush1.bf16.xpose.msra.mxu0 0
        %1179 = vmatprep.subr.bf16.mxu0 0
        %1180 = vmatpush1.bf16.xpose.msra.mxu0 0
        %1181 = vmatprep.subr.bf16.mxu0 0
        %1182 = vmatpush1.bf16.xpose.msra.mxu0 0
        %1183 = vmatprep.subr.bf16.mxu0 0
        %1184 = vmatpush1.bf16.xpose.msra.mxu0 0
        %1185 = vmatprep.subr.bf16.mxu0 0
        %1186 = vmatpush1.bf16.xpose.msra.mxu0 0
        %1187 = vmatprep.subr.bf16.mxu0 0
        %1188 = vmatpush1.bf16.xpose.msra.mxu0 0
        %1189 = vmatprep.mubr.bf16.mxu0 0
        %1190 = vmatmul.mubr.bf16.gmra.mrb[0].mxu0 %v1152
        %v1191 = vpop.f32.mrb[0].mxu0
        %v1192 = vadd.f32 0.0, %v1191
        %v1193 = vpop.f32.mrb[0].mxu0
        %v1194 = vpop.f32.mrb[0].mxu0
        %v1195 = vpop.f32.mrb[0].mxu0
        %1196 = vdwg.mxu0
        %vm1197 = vcmask 130048
        %v1198 = vsel %vm1197, %v1054, -inf
        %1199 = vmax.xlane.f32.xlu0 %v1198
        %v1200 = vpop.xlane.xlu0 %1199
        %v1201 = vsel %vm1197, %v1100, -inf
        %1202 = vmax.xlane.f32.xlu0 %v1201
        %v1203 = vpop.xlane.xlu0 %1202
        %v1204 = vsel %vm1197, %v1146, -inf
        %1205 = vmax.xlane.f32.xlu0 %v1204
        %v1206 = vpop.xlane.xlu0 %1205
        %v1207 = vsel %vm1197, %v1192, -inf
        %1208 = vmax.xlane.f32.xlu0 %v1207
        %v1209 = vpop.xlane.xlu0 %1208
        %v1210 = vsub.f32 %v1054, %v1200
        %v1211 = vsub.f32 %v1100, %v1203
        %v1212 = vsub.f32 %v1146, %v1206
        %v1213 = vsub.f32 %v1192, %v1209
        %v1214 = vmul.f32 %v1210, 1.442695
        %v1215 = vpow.pop %v1214
        %v1216 = vmul.f32 %v1211, 1.442695
        %v1217 = vpow.pop %v1216
        %v1218 = vmul.f32 %v1212, 1.442695
        %v1219 = vpow.pop %v1218
        %v1220 = vmul.f32 %v1213, 1.442695
        %v1221 = vpow.pop %v1220
        %v1222 = vsel %vm1197, %v1215, 0.0
        %1223 = vadd.xlane.f32.xlu0 %v1222
        %v1224 = vpop.xlane.xlu0 %1223
        %v1225 = vsel %vm1197, %v1217, 0.0
        %1226 = vadd.xlane.f32.xlu0 %v1225
        %v1227 = vpop.xlane.xlu0 %1226
        %v1228 = vsel %vm1197, %v1219, 0.0
        %1229 = vadd.xlane.f32.xlu0 %v1228
        %v1230 = vpop.xlane.xlu0 %1229
        %v1231 = vsel %vm1197, %v1221, 0.0
        %1232 = vadd.xlane.f32.xlu0 %v1231
        %v1233 = vpop.xlane.xlu0 %1232
        %v1234 = vpack.c.bf16 %v1215, %v1215
        %v1235 = vpack.c.bf16 %v1217, %v1217
        %v1236 = vpack.c.bf16 %v1219, %v1219
        %v1237 = vpack.c.bf16 %v1221, %v1221
        %v1239 = vsel %vm1197, %v1234, 0
        %1241 = vmatprep.subr.bf16.mxu0 0
        %1242 = vmatpush1.bf16.msra.mxu0 %v1008
        %1243 = vmatprep.subr.bf16.mxu0 0
        %1244 = vmatpush1.bf16.msra.mxu0 0
        %1245 = vmatprep.subr.bf16.mxu0 0
        %1246 = vmatpush1.bf16.msra.mxu0 0
        %1247 = vmatprep.subr.bf16.mxu0 0
        %1248 = vmatpush1.bf16.msra.mxu0 0
        %1249 = vmatprep.subr.bf16.mxu0 0
        %1250 = vmatpush1.bf16.msra.mxu0 0
        %1251 = vmatprep.subr.bf16.mxu0 0
        %1252 = vmatpush1.bf16.msra.mxu0 0
        %1253 = vmatprep.subr.bf16.mxu0 0
        %1254 = vmatpush1.bf16.msra.mxu0 0
        %1255 = vmatprep.subr.bf16.mxu0 0
        %1256 = vmatpush1.bf16.msra.mxu0 0
        %1257 = vmatprep.subr.bf16.mxu0 0
        %1258 = vmatpush1.bf16.msra.mxu0 0
        %1259 = vmatprep.subr.bf16.mxu0 0
        %1260 = vmatpush1.bf16.msra.mxu0 0
        %1261 = vmatprep.subr.bf16.mxu0 0
        %1262 = vmatpush1.bf16.msra.mxu0 0
        %1263 = vmatprep.subr.bf16.mxu0 0
        %1264 = vmatpush1.bf16.msra.mxu0 0
        %1265 = vmatprep.subr.bf16.mxu0 0
        %1266 = vmatpush1.bf16.msra.mxu0 0
        %1267 = vmatprep.subr.bf16.mxu0 0
        %1268 = vmatpush1.bf16.msra.mxu0 0
        %1269 = vmatprep.subr.bf16.mxu0 0
        %1270 = vmatpush1.bf16.msra.mxu0 0
        %1271 = vmatprep.subr.bf16.mxu0 0
        %1272 = vmatpush1.bf16.msra.mxu0 0
        %1273 = vmatprep.mubr.bf16.mxu0 0
        %1274 = vmatmul.mubr.bf16.gmra.mrb[0].mxu0 %v1239
        %v1275 = vpop.f32.mrb[0].mxu0
        %v1276 = vadd.f32 0.0, %v1275
        %v1277 = vpop.f32.mrb[0].mxu0
        %v1278 = vpop.f32.mrb[0].mxu0
        %v1279 = vpop.f32.mrb[0].mxu0
        %1280 = vdwg.mxu0
        %v1282 = vsel %vm1197, %v1235, 0
        %1284 = vmatprep.subr.bf16.mxu0 0
        %1285 = vmatpush1.bf16.msra.mxu0 %v1009
        %1286 = vmatprep.subr.bf16.mxu0 0
        %1287 = vmatpush1.bf16.msra.mxu0 0
        %1288 = vmatprep.subr.bf16.mxu0 0
        %1289 = vmatpush1.bf16.msra.mxu0 0
        %1290 = vmatprep.subr.bf16.mxu0 0
        %1291 = vmatpush1.bf16.msra.mxu0 0
        %1292 = vmatprep.subr.bf16.mxu0 0
        %1293 = vmatpush1.bf16.msra.mxu0 0
        %1294 = vmatprep.subr.bf16.mxu0 0
        %1295 = vmatpush1.bf16.msra.mxu0 0
        %1296 = vmatprep.subr.bf16.mxu0 0
        %1297 = vmatpush1.bf16.msra.mxu0 0
        %1298 = vmatprep.subr.bf16.mxu0 0
        %1299 = vmatpush1.bf16.msra.mxu0 0
        %1300 = vmatprep.subr.bf16.mxu0 0
        %1301 = vmatpush1.bf16.msra.mxu0 0
        %1302 = vmatprep.subr.bf16.mxu0 0
        %1303 = vmatpush1.bf16.msra.mxu0 0
        %1304 = vmatprep.subr.bf16.mxu0 0
        %1305 = vmatpush1.bf16.msra.mxu0 0
        %1306 = vmatprep.subr.bf16.mxu0 0
        %1307 = vmatpush1.bf16.msra.mxu0 0
        %1308 = vmatprep.subr.bf16.mxu0 0
        %1309 = vmatpush1.bf16.msra.mxu0 0
        %1310 = vmatprep.subr.bf16.mxu0 0
        %1311 = vmatpush1.bf16.msra.mxu0 0
        %1312 = vmatprep.subr.bf16.mxu0 0
        %1313 = vmatpush1.bf16.msra.mxu0 0
        %1314 = vmatprep.subr.bf16.mxu0 0
        %1315 = vmatpush1.bf16.msra.mxu0 0
        %1316 = vmatprep.mubr.bf16.mxu0 0
        %1317 = vmatmul.mubr.bf16.gmra.mrb[0].mxu0 %v1282
        %v1318 = vpop.f32.mrb[0].mxu0
        %v1319 = vadd.f32 0.0, %v1318
        %v1320 = vpop.f32.mrb[0].mxu0
        %v1321 = vpop.f32.mrb[0].mxu0
        %v1322 = vpop.f32.mrb[0].mxu0
        %1323 = vdwg.mxu0
        %v1325 = vsel %vm1197, %v1236, 0
        %1327 = vmatprep.subr.bf16.mxu0 0
        %1328 = vmatpush1.bf16.msra.mxu0 %v1010
        %1329 = vmatprep.subr.bf16.mxu0 0
        %1330 = vmatpush1.bf16.msra.mxu0 0
        %1331 = vmatprep.subr.bf16.mxu0 0
        %1332 = vmatpush1.bf16.msra.mxu0 0
        %1333 = vmatprep.subr.bf16.mxu0 0
        %1334 = vmatpush1.bf16.msra.mxu0 0
        %1335 = vmatprep.subr.bf16.mxu0 0
        %1336 = vmatpush1.bf16.msra.mxu0 0
        %1337 = vmatprep.subr.bf16.mxu0 0
        %1338 = vmatpush1.bf16.msra.mxu0 0
        %1339 = vmatprep.subr.bf16.mxu0 0
        %1340 = vmatpush1.bf16.msra.mxu0 0
        %1341 = vmatprep.subr.bf16.mxu0 0
        %1342 = vmatpush1.bf16.msra.mxu0 0
        %1343 = vmatprep.subr.bf16.mxu0 0
        %1344 = vmatpush1.bf16.msra.mxu0 0
        %1345 = vmatprep.subr.bf16.mxu0 0
        %1346 = vmatpush1.bf16.msra.mxu0 0
        %1347 = vmatprep.subr.bf16.mxu0 0
        %1348 = vmatpush1.bf16.msra.mxu0 0
        %1349 = vmatprep.subr.bf16.mxu0 0
        %1350 = vmatpush1.bf16.msra.mxu0 0
        %1351 = vmatprep.subr.bf16.mxu0 0
        %1352 = vmatpush1.bf16.msra.mxu0 0
        %1353 = vmatprep.subr.bf16.mxu0 0
        %1354 = vmatpush1.bf16.msra.mxu0 0
        %1355 = vmatprep.subr.bf16.mxu0 0
        %1356 = vmatpush1.bf16.msra.mxu0 0
        %1357 = vmatprep.subr.bf16.mxu0 0
        %1358 = vmatpush1.bf16.msra.mxu0 0
        %1359 = vmatprep.mubr.bf16.mxu0 0
        %1360 = vmatmul.mubr.bf16.gmra.mrb[0].mxu0 %v1325
        %v1361 = vpop.f32.mrb[0].mxu0
        %v1362 = vadd.f32 0.0, %v1361
        %v1363 = vpop.f32.mrb[0].mxu0
        %v1364 = vpop.f32.mrb[0].mxu0
        %v1365 = vpop.f32.mrb[0].mxu0
        %1366 = vdwg.mxu0
        %v1368 = vsel %vm1197, %v1237, 0
        %1370 = vmatprep.subr.bf16.mxu0 0
        %1371 = vmatpush1.bf16.msra.mxu0 %v1011
        %1372 = vmatprep.subr.bf16.mxu0 0
        %1373 = vmatpush1.bf16.msra.mxu0 0
        %1374 = vmatprep.subr.bf16.mxu0 0
        %1375 = vmatpush1.bf16.msra.mxu0 0
        %1376 = vmatprep.subr.bf16.mxu0 0
        %1377 = vmatpush1.bf16.msra.mxu0 0
        %1378 = vmatprep.subr.bf16.mxu0 0
        %1379 = vmatpush1.bf16.msra.mxu0 0
        %1380 = vmatprep.subr.bf16.mxu0 0
        %1381 = vmatpush1.bf16.msra.mxu0 0
        %1382 = vmatprep.subr.bf16.mxu0 0
        %1383 = vmatpush1.bf16.msra.mxu0 0
        %1384 = vmatprep.subr.bf16.mxu0 0
        %1385 = vmatpush1.bf16.msra.mxu0 0
        %1386 = vmatprep.subr.bf16.mxu0 0
        %1387 = vmatpush1.bf16.msra.mxu0 0
        %1388 = vmatprep.subr.bf16.mxu0 0
        %1389 = vmatpush1.bf16.msra.mxu0 0
        %1390 = vmatprep.subr.bf16.mxu0 0
        %1391 = vmatpush1.bf16.msra.mxu0 0
        %1392 = vmatprep.subr.bf16.mxu0 0
        %1393 = vmatpush1.bf16.msra.mxu0 0
        %1394 = vmatprep.subr.bf16.mxu0 0
        %1395 = vmatpush1.bf16.msra.mxu0 0
        %1396 = vmatprep.subr.bf16.mxu0 0
        %1397 = vmatpush1.bf16.msra.mxu0 0
        %1398 = vmatprep.subr.bf16.mxu0 0
        %1399 = vmatpush1.bf16.msra.mxu0 0
        %1400 = vmatprep.subr.bf16.mxu0 0
        %1401 = vmatpush1.bf16.msra.mxu0 0
        %1402 = vmatprep.mubr.bf16.mxu0 0
        %1403 = vmatmul.mubr.bf16.gmra.mrb[0].mxu0 %v1368
        %v1404 = vpop.f32.mrb[0].mxu0
        %v1405 = vadd.f32 0.0, %v1404
        %v1406 = vpop.f32.mrb[0].mxu0
        %v1407 = vpop.f32.mrb[0].mxu0
        %v1408 = vpop.f32.mrb[0].mxu0
        %1409 = vdwg.mxu0
        %v1410 = vrcp.pop %v1224
        %v1411 = vrcp.pop %v1227
        %v1412 = vrcp.pop %v1230
        %v1413 = vrcp.pop %v1233
        %v1414 = vmul.f32 %v1276, %v1410
        %v1415 = vmul.f32 %v1319, %v1411
        %v1416 = vmul.f32 %v1362, %v1412
        %v1417 = vmul.f32 %v1405, %v1413
        %v1418 = vpack.c.bf16 %v1414, %v1414
        %v1419 = vpack.c.bf16 %v1415, %v1415
        %v1420 = vpack.c.bf16 %v1416, %v1416
        %v1421 = vpack.c.bf16 %v1417, %v1417
        %v1422 = vld [vmem:[#allocation11] sm:$0xf]
        %v1423 = vld [vmem:[#allocation11 + $0x4] sm:$0xf]
        %v1424 = vld [vmem:[#allocation11 + $0x8] sm:$0xf]
        %v1425 = vld [vmem:[#allocation11 + $0xc] sm:$0xf]
        %s1426 = scalar_lea.vmem [#allocation11], 16
        %v1427 = vld [vmem:[%s1426] sm:$0xf]
        %v1428 = vld [vmem:[%s1426 + $0x4] sm:$0xf]
        %v1429 = vld [vmem:[%s1426 + $0x8] sm:$0xf]
        %v1430 = vld [vmem:[%s1426 + $0xc] sm:$0xf]
        %v1435 = vunpack.c.l.b16 %v1427
        %v1436 = vunpack.c.l.b16 %v1428
        %v1437 = vunpack.c.l.b16 %v1429
        %v1438 = vunpack.c.l.b16 %v1430
        %v1439 = vpack.c.b16 %v1436, %v1435
        %v1440 = vpack.c.b16 %v1438, %v1437
        %v1444 = vsel %vm1012, %v1419, 0
        %1446 = vmatprep.subr.bf16.mxu0 0
        %1447 = vmatpush1.bf16.msra.mxu0 %v1439
        %1448 = vmatprep.subr.bf16.mxu0 0
        %1449 = vmatpush1.bf16.msra.mxu0 %v1440
        %1450 = vmatprep.subr.bf16.mxu0 0
        %1451 = vmatpush1.bf16.msra.mxu0 0
        %1452 = vmatprep.subr.bf16.mxu0 0
        %1453 = vmatpush1.bf16.msra.mxu0 0
        %1454 = vmatprep.subr.bf16.mxu0 0
        %1455 = vmatpush1.bf16.msra.mxu0 0
        %1456 = vmatprep.subr.bf16.mxu0 0
        %1457 = vmatpush1.bf16.msra.mxu0 0
        %1458 = vmatprep.subr.bf16.mxu0 0
        %1459 = vmatpush1.bf16.msra.mxu0 0
        %1460 = vmatprep.subr.bf16.mxu0 0
        %1461 = vmatpush1.bf16.msra.mxu0 0
        %1462 = vmatprep.subr.bf16.mxu0 0
        %1463 = vmatpush1.bf16.msra.mxu0 0
        %1464 = vmatprep.subr.bf16.mxu0 0
        %1465 = vmatpush1.bf16.msra.mxu0 0
        %1466 = vmatprep.subr.bf16.mxu0 0
        %1467 = vmatpush1.bf16.msra.mxu0 0
        %1468 = vmatprep.subr.bf16.mxu0 0
        %1469 = vmatpush1.bf16.msra.mxu0 0
        %1470 = vmatprep.subr.bf16.mxu0 0
        %1471 = vmatpush1.bf16.msra.mxu0 0
        %1472 = vmatprep.subr.bf16.mxu0 0
        %1473 = vmatpush1.bf16.msra.mxu0 0
        %1474 = vmatprep.subr.bf16.mxu0 0
        %1475 = vmatpush1.bf16.msra.mxu0 0
        %1476 = vmatprep.subr.bf16.mxu0 0
        %1477 = vmatpush1.bf16.msra.mxu0 0
        %1478 = vmatprep.mubr.bf16.mxu0 0
        %1479 = vmatmul.mubr.bf16.gmra.mrb[0].mxu0 %v1444
        %v1480 = vpop.f32.mrb[0].mxu0
        %v1481 = vadd.f32 0.0, %v1480
        %v1482 = vpop.f32.mrb[0].mxu0
        %v1483 = vpop.f32.mrb[0].mxu0
        %v1484 = vpop.f32.mrb[0].mxu0
        %1485 = vdwg.mxu0
        %v1490 = vunpack.c.l.b16 %v1422
        %v1491 = vunpack.c.l.b16 %v1423
        %v1492 = vunpack.c.l.b16 %v1424
        %v1493 = vunpack.c.l.b16 %v1425
        %v1494 = vpack.c.b16 %v1491, %v1490
        %v1495 = vpack.c.b16 %v1493, %v1492
        %v1499 = vsel %vm1012, %v1418, 0
        %1501 = vmatprep.subr.bf16.mxu0 0
        %1502 = vmatpush1.bf16.msra.mxu0 %v1494
        %1503 = vmatprep.subr.bf16.mxu0 0
        %1504 = vmatpush1.bf16.msra.mxu0 %v1495
        %1505 = vmatprep.subr.bf16.mxu0 0
        %1506 = vmatpush1.bf16.msra.mxu0 0
        %1507 = vmatprep.subr.bf16.mxu0 0
        %1508 = vmatpush1.bf16.msra.mxu0 0
        %1509 = vmatprep.subr.bf16.mxu0 0
        %1510 = vmatpush1.bf16.msra.mxu0 0
        %1511 = vmatprep.subr.bf16.mxu0 0
        %1512 = vmatpush1.bf16.msra.mxu0 0
        %1513 = vmatprep.subr.bf16.mxu0 0
        %1514 = vmatpush1.bf16.msra.mxu0 0
        %1515 = vmatprep.subr.bf16.mxu0 0
        %1516 = vmatpush1.bf16.msra.mxu0 0
        %1517 = vmatprep.subr.bf16.mxu0 0
        %1518 = vmatpush1.bf16.msra.mxu0 0
        %1519 = vmatprep.subr.bf16.mxu0 0
        %1520 = vmatpush1.bf16.msra.mxu0 0
        %1521 = vmatprep.subr.bf16.mxu0 0
        %1522 = vmatpush1.bf16.msra.mxu0 0
        %1523 = vmatprep.subr.bf16.mxu0 0
        %1524 = vmatpush1.bf16.msra.mxu0 0
        %1525 = vmatprep.subr.bf16.mxu0 0
        %1526 = vmatpush1.bf16.msra.mxu0 0
        %1527 = vmatprep.subr.bf16.mxu0 0
        %1528 = vmatpush1.bf16.msra.mxu0 0
        %1529 = vmatprep.subr.bf16.mxu0 0
        %1530 = vmatpush1.bf16.msra.mxu0 0
        %1531 = vmatprep.subr.bf16.mxu0 0
        %1532 = vmatpush1.bf16.msra.mxu0 0
        %1533 = vmatprep.mubr.bf16.mxu0 0
        %1534 = vmatmul.mubr.bf16.gmra.mrb[0].mxu0 %v1499
        %v1535 = vpop.f32.mrb[0].mxu0
        %v1536 = vadd.f32 %v1481, %v1535
        %v1537 = vpop.f32.mrb[0].mxu0
        %v1538 = vpop.f32.mrb[0].mxu0
        %v1539 = vpop.f32.mrb[0].mxu0
        %1540 = vdwg.mxu0
        %s1541 = scalar_lea.vmem [#allocation11], 32
        %v1542 = vld [vmem:[%s1541] sm:$0xf]
        %v1543 = vld [vmem:[%s1541 + $0x4] sm:$0xf]
        %v1544 = vld [vmem:[%s1541 + $0x8] sm:$0xf]
        %v1545 = vld [vmem:[%s1541 + $0xc] sm:$0xf]
        %v1550 = vunpack.c.l.b16 %v1542
        %v1551 = vunpack.c.l.b16 %v1543
        %v1552 = vunpack.c.l.b16 %v1544
        %v1553 = vunpack.c.l.b16 %v1545
        %v1554 = vpack.c.b16 %v1551, %v1550
        %v1555 = vpack.c.b16 %v1553, %v1552
        %v1559 = vsel %vm1012, %v1420, 0
        %1561 = vmatprep.subr.bf16.mxu0 0
        %1562 = vmatpush1.bf16.msra.mxu0 %v1554
        %1563 = vmatprep.subr.bf16.mxu0 0
        %1564 = vmatpush1.bf16.msra.mxu0 %v1555
        %1565 = vmatprep.subr.bf16.mxu0 0
        %1566 = vmatpush1.bf16.msra.mxu0 0
        %1567 = vmatprep.subr.bf16.mxu0 0
        %1568 = vmatpush1.bf16.msra.mxu0 0
        %1569 = vmatprep.subr.bf16.mxu0 0
        %1570 = vmatpush1.bf16.msra.mxu0 0
        %1571 = vmatprep.subr.bf16.mxu0 0
        %1572 = vmatpush1.bf16.msra.mxu0 0
        %1573 = vmatprep.subr.bf16.mxu0 0
        %1574 = vmatpush1.bf16.msra.mxu0 0
        %1575 = vmatprep.subr.bf16.mxu0 0
        %1576 = vmatpush1.bf16.msra.mxu0 0
        %1577 = vmatprep.subr.bf16.mxu0 0
        %1578 = vmatpush1.bf16.msra.mxu0 0
        %1579 = vmatprep.subr.bf16.mxu0 0
        %1580 = vmatpush1.bf16.msra.mxu0 0
        %1581 = vmatprep.subr.bf16.mxu0 0
        %1582 = vmatpush1.bf16.msra.mxu0 0
        %1583 = vmatprep.subr.bf16.mxu0 0
        %1584 = vmatpush1.bf16.msra.mxu0 0
        %1585 = vmatprep.subr.bf16.mxu0 0
        %1586 = vmatpush1.bf16.msra.mxu0 0
        %1587 = vmatprep.subr.bf16.mxu0 0
        %1588 = vmatpush1.bf16.msra.mxu0 0
        %1589 = vmatprep.subr.bf16.mxu0 0
        %1590 = vmatpush1.bf16.msra.mxu0 0
        %1591 = vmatprep.subr.bf16.mxu0 0
        %1592 = vmatpush1.bf16.msra.mxu0 0
        %1593 = vmatprep.mubr.bf16.mxu0 0
        %1594 = vmatmul.mubr.bf16.gmra.mrb[0].mxu0 %v1559
        %v1595 = vpop.f32.mrb[0].mxu0
        %v1596 = vadd.f32 0.0, %v1595
        %v1597 = vpop.f32.mrb[0].mxu0
        %v1598 = vpop.f32.mrb[0].mxu0
        %v1599 = vpop.f32.mrb[0].mxu0
        %1600 = vdwg.mxu0
        %v1601 = vadd.f32 %v1536, %v1596
        %s1602 = scalar_lea.vmem [#allocation11], 48
        %v1603 = vld [vmem:[%s1602] sm:$0xf]
        %v1604 = vld [vmem:[%s1602 + $0x4] sm:$0xf]
        %v1605 = vld [vmem:[%s1602 + $0x8] sm:$0xf]
        %v1606 = vld [vmem:[%s1602 + $0xc] sm:$0xf]
        %v1611 = vunpack.c.l.b16 %v1603
        %v1612 = vunpack.c.l.b16 %v1604
        %v1613 = vunpack.c.l.b16 %v1605
        %v1614 = vunpack.c.l.b16 %v1606
        %v1615 = vpack.c.b16 %v1612, %v1611
        %v1616 = vpack.c.b16 %v1614, %v1613
        %v1620 = vsel %vm1012, %v1421, 0
        %1622 = vmatprep.subr.bf16.mxu0 0
        %1623 = vmatpush1.bf16.msra.mxu0 %v1615
        %1624 = vmatprep.subr.bf16.mxu0 0
        %1625 = vmatpush1.bf16.msra.mxu0 %v1616
        %1626 = vmatprep.subr.bf16.mxu0 0
        %1627 = vmatpush1.bf16.msra.mxu0 0
        %1628 = vmatprep.subr.bf16.mxu0 0
        %1629 = vmatpush1.bf16.msra.mxu0 0
        %1630 = vmatprep.subr.bf16.mxu0 0
        %1631 = vmatpush1.bf16.msra.mxu0 0
        %1632 = vmatprep.subr.bf16.mxu0 0
        %1633 = vmatpush1.bf16.msra.mxu0 0
        %1634 = vmatprep.subr.bf16.mxu0 0
        %1635 = vmatpush1.bf16.msra.mxu0 0
        %1636 = vmatprep.subr.bf16.mxu0 0
        %1637 = vmatpush1.bf16.msra.mxu0 0
        %1638 = vmatprep.subr.bf16.mxu0 0
        %1639 = vmatpush1.bf16.msra.mxu0 0
        %1640 = vmatprep.subr.bf16.mxu0 0
        %1641 = vmatpush1.bf16.msra.mxu0 0
        %1642 = vmatprep.subr.bf16.mxu0 0
        %1643 = vmatpush1.bf16.msra.mxu0 0
        %1644 = vmatprep.subr.bf16.mxu0 0
        %1645 = vmatpush1.bf16.msra.mxu0 0
        %1646 = vmatprep.subr.bf16.mxu0 0
        %1647 = vmatpush1.bf16.msra.mxu0 0
        %1648 = vmatprep.subr.bf16.mxu0 0
        %1649 = vmatpush1.bf16.msra.mxu0 0
        %1650 = vmatprep.subr.bf16.mxu0 0
        %1651 = vmatpush1.bf16.msra.mxu0 0
        %1652 = vmatprep.subr.bf16.mxu0 0
        %1653 = vmatpush1.bf16.msra.mxu0 0
        %1654 = vmatprep.mubr.bf16.mxu0 0
        %1655 = vmatmul.mubr.bf16.gmra.mrb[0].mxu0 %v1620
        %v1656 = vpop.f32.mrb[0].mxu0
        %v1657 = vadd.f32 0.0, %v1656
        %v1658 = vpop.f32.mrb[0].mxu0
        %v1659 = vpop.f32.mrb[0].mxu0
        %v1660 = vpop.f32.mrb[0].mxu0
        %1661 = vdwg.mxu0
        %v1662 = vadd.f32 %v1601, %v1657
        %v1663 = vld [vmem:[%s6] sm:$0x1]
        %v1665 = vlaneseq
        %v1666 = vshrl.u32 %v1665, 7
        %v1667 = vsub.s32 0, %v1666
        %v1668 = vrot.slane %v1663, %v1667
        %v1670 = vadd.f32 %v1662, %v1668
        %v1671 = vadd.f32 %v838, %v1670
        %1672 = vadd.xlane.f32.xlu0 %v1671
        %v1673 = vpop.xlane.xlu0 %1672
        %v1674 = vmul.f32 %v1673, %v841
        %v1675 = vsub.f32 %v1671, %v1674
        %v1676 = vmul.f32 %v1675, %v1675
        %1677 = vadd.xlane.f32.xlu0 %v1676
        %v1678 = vpop.xlane.xlu0 %1677
        %v1679 = vmul.f32 %v1678, %v841
        %v1680 = vadd.f32 %v1679, 1e-05
        %v1681 = vrsqrt.pop %v1680
        %v1682 = vmul.f32 %v1675, %v1681
        %v1683 = vld [vmem:[%s9] sm:$0x1]
        %v1685 = vlaneseq
        %v1686 = vshrl.u32 %v1685, 7
        %v1687 = vsub.s32 0, %v1686
        %v1688 = vrot.slane %v1683, %v1687
        %v1690 = vmul.f32 %v1682, %v1688
        %v1691 = vld [vmem:[%s10] sm:$0x1]
        %v1693 = vlaneseq
        %v1694 = vshrl.u32 %v1693, 7
        %v1695 = vsub.s32 0, %v1694
        %v1696 = vrot.slane %v1691, %v1695
        %v1698 = vadd.f32 %v1690, %v1696
        %v1699 = vpack.c.bf16 %v1698, %v1698
        %v1700 = vld [vmem:[#allocation13] sm:$0xff]
        %v1701 = vld [vmem:[#allocation13 + $0x8] sm:$0xff]
        %v1702 = vld [vmem:[#allocation13 + $0x10] sm:$0xff]
        %v1703 = vld [vmem:[#allocation13 + $0x18] sm:$0xff]
        %v1704 = vld [vmem:[#allocation13 + $0x20] sm:$0xff]
        %v1705 = vld [vmem:[#allocation13 + $0x28] sm:$0xff]
        %v1706 = vld [vmem:[#allocation13 + $0x30] sm:$0xff]
        %v1707 = vld [vmem:[#allocation13 + $0x38] sm:$0xff]
        %v1708 = vld [vmem:[#allocation13 + $0x40] sm:$0xff]
        %v1709 = vld [vmem:[#allocation13 + $0x48] sm:$0xff]
        %v1710 = vld [vmem:[#allocation13 + $0x50] sm:$0xff]
        %v1711 = vld [vmem:[#allocation13 + $0x58] sm:$0xff]
        %v1712 = vld [vmem:[#allocation13 + $0x60] sm:$0xff]
        %v1713 = vld [vmem:[#allocation13 + $0x68] sm:$0xff]
        %v1714 = vld [vmem:[#allocation13 + $0x70] sm:$0xff]
        %v1715 = vld [vmem:[#allocation13 + $0x78] sm:$0xff]
        %v1716 = vld [vmem:[#allocation13 + $0x80] sm:$0xff]
        %v1717 = vld [vmem:[#allocation13 + $0x88] sm:$0xff]
        %v1718 = vld [vmem:[#allocation13 + $0x90] sm:$0xff]
        %v1719 = vld [vmem:[#allocation13 + $0x98] sm:$0xff]
        %v1720 = vld [vmem:[#allocation13 + $0xa0] sm:$0xff]
        %v1721 = vld [vmem:[#allocation13 + $0xa8] sm:$0xff]
        %v1722 = vld [vmem:[#allocation13 + $0xb0] sm:$0xff]
        %v1723 = vld [vmem:[#allocation13 + $0xb8] sm:$0xff]
        %v1724 = vld [vmem:[#allocation13 + $0xc0] sm:$0xff]
        %v1725 = vld [vmem:[#allocation13 + $0xc8] sm:$0xff]
        %v1726 = vld [vmem:[#allocation13 + $0xd0] sm:$0xff]
        %v1727 = vld [vmem:[#allocation13 + $0xd8] sm:$0xff]
        %v1728 = vld [vmem:[#allocation13 + $0xe0] sm:$0xff]
        %v1729 = vld [vmem:[#allocation13 + $0xe8] sm:$0xff]
        %v1730 = vld [vmem:[#allocation13 + $0xf0] sm:$0xff]
        %v1731 = vld [vmem:[#allocation13 + $0xf8] sm:$0xff]
        %v1732 = vld [vmem:[%s12] sm:$0xf]
        %v1734 = vlaneseq
        %v1735 = vshrl.u32 %v1734, 7
        %v1736 = vsub.s32 0, %v1735
        %v1737 = vrot.slane %v1732, %v1736
        %v1738 = vlaneseq
        %v1739 = vshrl.u32 %v1738, 7
        %v1740 = vsub.s32 1, %v1739
        %v1741 = vrot.slane %v1732, %v1740
        %v1742 = vlaneseq
        %v1743 = vshrl.u32 %v1742, 7
        %v1744 = vsub.s32 2, %v1743
        %v1745 = vrot.slane %v1732, %v1744
        %v1746 = vlaneseq
        %v1747 = vshrl.u32 %v1746, 7
        %v1748 = vsub.s32 3, %v1747
        %v1749 = vrot.slane %v1732, %v1748
        %v1786 = vunpack.c.l.b16 %v1700
        %v1787 = vunpack.c.h.b16 %v1700
        %v1788 = vunpack.c.l.b16 %v1701
        %v1789 = vunpack.c.h.b16 %v1701
        %v1790 = vunpack.c.l.b16 %v1702
        %v1791 = vunpack.c.h.b16 %v1702
        %v1792 = vunpack.c.l.b16 %v1703
        %v1793 = vunpack.c.h.b16 %v1703
        %v1794 = vunpack.c.l.b16 %v1704
        %v1795 = vunpack.c.h.b16 %v1704
        %v1796 = vunpack.c.l.b16 %v1705
        %v1797 = vunpack.c.h.b16 %v1705
        %v1798 = vunpack.c.l.b16 %v1706
        %v1799 = vunpack.c.h.b16 %v1706
        %v1800 = vunpack.c.l.b16 %v1707
        %v1801 = vunpack.c.h.b16 %v1707
        %v1802 = vunpack.c.l.b16 %v1708
        %v1803 = vunpack.c.h.b16 %v1708
        %v1804 = vunpack.c.l.b16 %v1709
        %v1805 = vunpack.c.h.b16 %v1709
        %v1806 = vunpack.c.l.b16 %v1710
        %v1807 = vunpack.c.h.b16 %v1710
        %v1808 = vunpack.c.l.b16 %v1711
        %v1809 = vunpack.c.h.b16 %v1711
        %v1810 = vunpack.c.l.b16 %v1712
        %v1811 = vunpack.c.h.b16 %v1712
        %v1812 = vunpack.c.l.b16 %v1713
        %v1813 = vunpack.c.h.b16 %v1713
        %v1814 = vunpack.c.l.b16 %v1714
        %v1815 = vunpack.c.h.b16 %v1714
        %v1816 = vunpack.c.l.b16 %v1715
        %v1817 = vunpack.c.h.b16 %v1715
        %v1818 = vunpack.c.l.b16 %v1716
        %v1819 = vunpack.c.h.b16 %v1716
        %v1820 = vunpack.c.l.b16 %v1717
        %v1821 = vunpack.c.h.b16 %v1717
        %v1822 = vunpack.c.l.b16 %v1718
        %v1823 = vunpack.c.h.b16 %v1718
        %v1824 = vunpack.c.l.b16 %v1719
        %v1825 = vunpack.c.h.b16 %v1719
        %v1826 = vunpack.c.l.b16 %v1720
        %v1827 = vunpack.c.h.b16 %v1720
        %v1828 = vunpack.c.l.b16 %v1721
        %v1829 = vunpack.c.h.b16 %v1721
        %v1830 = vunpack.c.l.b16 %v1722
        %v1831 = vunpack.c.h.b16 %v1722
        %v1832 = vunpack.c.l.b16 %v1723
        %v1833 = vunpack.c.h.b16 %v1723
        %v1834 = vunpack.c.l.b16 %v1724
        %v1835 = vunpack.c.h.b16 %v1724
        %v1836 = vunpack.c.l.b16 %v1725
        %v1837 = vunpack.c.h.b16 %v1725
        %v1838 = vunpack.c.l.b16 %v1726
        %v1839 = vunpack.c.h.b16 %v1726
        %v1840 = vunpack.c.l.b16 %v1727
        %v1841 = vunpack.c.h.b16 %v1727
        %v1842 = vunpack.c.l.b16 %v1728
        %v1843 = vunpack.c.h.b16 %v1728
        %v1844 = vunpack.c.l.b16 %v1729
        %v1845 = vunpack.c.h.b16 %v1729
        %v1846 = vunpack.c.l.b16 %v1730
        %v1847 = vunpack.c.h.b16 %v1730
        %v1848 = vunpack.c.l.b16 %v1731
        %v1849 = vunpack.c.h.b16 %v1731
        %v1850 = vpack.c.b16 %v1790, %v1786
        %v1851 = vpack.c.b16 %v1791, %v1787
        %v1852 = vpack.c.b16 %v1792, %v1788
        %v1853 = vpack.c.b16 %v1793, %v1789
        %v1854 = vpack.c.b16 %v1798, %v1794
        %v1855 = vpack.c.b16 %v1799, %v1795
        %v1856 = vpack.c.b16 %v1800, %v1796
        %v1857 = vpack.c.b16 %v1801, %v1797
        %v1858 = vpack.c.b16 %v1806, %v1802
        %v1859 = vpack.c.b16 %v1807, %v1803
        %v1860 = vpack.c.b16 %v1808, %v1804
        %v1861 = vpack.c.b16 %v1809, %v1805
        %v1862 = vpack.c.b16 %v1814, %v1810
        %v1863 = vpack.c.b16 %v1815, %v1811
        %v1864 = vpack.c.b16 %v1816, %v1812
        %v1865 = vpack.c.b16 %v1817, %v1813
        %v1866 = vpack.c.b16 %v1822, %v1818
        %v1867 = vpack.c.b16 %v1823, %v1819
        %v1868 = vpack.c.b16 %v1824, %v1820
        %v1869 = vpack.c.b16 %v1825, %v1821
        %v1870 = vpack.c.b16 %v1830, %v1826
        %v1871 = vpack.c.b16 %v1831, %v1827
        %v1872 = vpack.c.b16 %v1832, %v1828
        %v1873 = vpack.c.b16 %v1833, %v1829
        %v1874 = vpack.c.b16 %v1838, %v1834
        %v1875 = vpack.c.b16 %v1839, %v1835
        %v1876 = vpack.c.b16 %v1840, %v1836
        %v1877 = vpack.c.b16 %v1841, %v1837
        %v1878 = vpack.c.b16 %v1846, %v1842
        %v1879 = vpack.c.b16 %v1847, %v1843
        %v1880 = vpack.c.b16 %v1848, %v1844
        %v1881 = vpack.c.b16 %v1849, %v1845
        %1914 = vmatprep.subr.bf16.mxu0 %v1851
        %1915 = vmatpush1.bf16.msra.mxu0 %v1850
        %1916 = vmatprep.subr.bf16.mxu0 %v1855
        %1917 = vmatpush1.bf16.msra.mxu0 %v1854
        %1918 = vmatprep.subr.bf16.mxu0 %v1859
        %1919 = vmatpush1.bf16.msra.mxu0 %v1858
        %1920 = vmatprep.subr.bf16.mxu0 %v1863
        %1921 = vmatpush1.bf16.msra.mxu0 %v1862
        %1922 = vmatprep.subr.bf16.mxu0 %v1867
        %1923 = vmatpush1.bf16.msra.mxu0 %v1866
        %1924 = vmatprep.subr.bf16.mxu0 %v1871
        %1925 = vmatpush1.bf16.msra.mxu0 %v1870
        %1926 = vmatprep.subr.bf16.mxu0 %v1875
        %1927 = vmatpush1.bf16.msra.mxu0 %v1874
        %1928 = vmatprep.subr.bf16.mxu0 %v1879
        %1929 = vmatpush1.bf16.msra.mxu0 %v1878
        %1930 = vmatprep.subr.bf16.mxu0 0
        %1931 = vmatpush1.bf16.msra.mxu0 0
        %1932 = vmatprep.subr.bf16.mxu0 0
        %1933 = vmatpush1.bf16.msra.mxu0 0
        %1934 = vmatprep.subr.bf16.mxu0 0
        %1935 = vmatpush1.bf16.msra.mxu0 0
        %1936 = vmatprep.subr.bf16.mxu0 0
        %1937 = vmatpush1.bf16.msra.mxu0 0
        %1938 = vmatprep.subr.bf16.mxu0 0
        %1939 = vmatpush1.bf16.msra.mxu0 0
        %1940 = vmatprep.subr.bf16.mxu0 0
        %1941 = vmatpush1.bf16.msra.mxu0 0
        %1942 = vmatprep.subr.bf16.mxu0 0
        %1943 = vmatpush1.bf16.msra.mxu0 0
        %1944 = vmatprep.subr.bf16.mxu0 0
        %1945 = vmatpush1.bf16.msra.mxu0 0
        %1946 = vmatprep.mubr.bf16.mxu0 0
        %1947 = vmatmul.mubr.bf16.gmra.mrb[0].mxu0 %v1699
        %v1948 = vpop.f32.mrb[0].mxu0
        %v1949 = vadd.f32 %v1737, %v1948
        %v1950 = vpop.f32.mrb[0].mxu0
        %v1951 = vadd.f32 %v1741, %v1950
        %v1952 = vpop.f32.mrb[0].mxu0
        %v1953 = vpop.f32.mrb[0].mxu0
        %1954 = vdwg.mxu0
        %1955 = vmatprep.subr.bf16.mxu0 %v1853
        %1956 = vmatpush1.bf16.msra.mxu0 %v1852
        %1957 = vmatprep.subr.bf16.mxu0 %v1857
        %1958 = vmatpush1.bf16.msra.mxu0 %v1856
        %1959 = vmatprep.subr.bf16.mxu0 %v1861
        %1960 = vmatpush1.bf16.msra.mxu0 %v1860
        %1961 = vmatprep.subr.bf16.mxu0 %v1865
        %1962 = vmatpush1.bf16.msra.mxu0 %v1864
        %1963 = vmatprep.subr.bf16.mxu0 %v1869
        %1964 = vmatpush1.bf16.msra.mxu0 %v1868
        %1965 = vmatprep.subr.bf16.mxu0 %v1873
        %1966 = vmatpush1.bf16.msra.mxu0 %v1872
        %1967 = vmatprep.subr.bf16.mxu0 %v1877
        %1968 = vmatpush1.bf16.msra.mxu0 %v1876
        %1969 = vmatprep.subr.bf16.mxu0 %v1881
        %1970 = vmatpush1.bf16.msra.mxu0 %v1880
        %1971 = vmatprep.subr.bf16.mxu0 0
        %1972 = vmatpush1.bf16.msra.mxu0 0
        %1973 = vmatprep.subr.bf16.mxu0 0
        %1974 = vmatpush1.bf16.msra.mxu0 0
        %1975 = vmatprep.subr.bf16.mxu0 0
        %1976 = vmatpush1.bf16.msra.mxu0 0
        %1977 = vmatprep.subr.bf16.mxu0 0
        %1978 = vmatpush1.bf16.msra.mxu0 0
        %1979 = vmatprep.subr.bf16.mxu0 0
        %1980 = vmatpush1.bf16.msra.mxu0 0
        %1981 = vmatprep.subr.bf16.mxu0 0
        %1982 = vmatpush1.bf16.msra.mxu0 0
        %1983 = vmatprep.subr.bf16.mxu0 0
        %1984 = vmatpush1.bf16.msra.mxu0 0
        %1985 = vmatprep.subr.bf16.mxu0 0
        %1986 = vmatpush1.bf16.msra.mxu0 0
        %1987 = vmatprep.mubr.bf16.mxu0 0
        %1988 = vmatmul.mubr.bf16.gmra.mrb[0].mxu0 %v1699
        %v1989 = vpop.f32.mrb[0].mxu0
        %v1990 = vadd.f32 %v1745, %v1989
        %v1991 = vpop.f32.mrb[0].mxu0
        %v1992 = vadd.f32 %v1749, %v1991
        %v1993 = vpop.f32.mrb[0].mxu0
        %v1994 = vpop.f32.mrb[0].mxu0
        %1995 = vdwg.mxu0
        %v1996 = vmax.f32 %v1949, 0.0
        %v1997 = vmax.f32 %v1951, 0.0
        %v1998 = vmax.f32 %v1990, 0.0
        %v1999 = vmax.f32 %v1992, 0.0
        %v2000 = vpack.c.bf16 %v1996, %v1996
        %v2001 = vpack.c.bf16 %v1997, %v1997
        %v2002 = vpack.c.bf16 %v1998, %v1998
        %v2003 = vpack.c.bf16 %v1999, %v1999
        %v2004 = vld [vmem:[#allocation14] sm:$0xf]
        %v2005 = vld [vmem:[#allocation14 + $0x4] sm:$0xf]
        %v2006 = vld [vmem:[#allocation14 + $0x8] sm:$0xf]
        %v2007 = vld [vmem:[#allocation14 + $0xc] sm:$0xf]
        %v2008 = vld [vmem:[#allocation14 + $0x10] sm:$0xf]
        %v2009 = vld [vmem:[#allocation14 + $0x14] sm:$0xf]
        %v2010 = vld [vmem:[#allocation14 + $0x18] sm:$0xf]
        %v2011 = vld [vmem:[#allocation14 + $0x1c] sm:$0xf]
        %v2012 = vld [vmem:[#allocation14 + $0x20] sm:$0xf]
        %v2013 = vld [vmem:[#allocation14 + $0x24] sm:$0xf]
        %v2014 = vld [vmem:[#allocation14 + $0x28] sm:$0xf]
        %v2015 = vld [vmem:[#allocation14 + $0x2c] sm:$0xf]
        %v2016 = vld [vmem:[#allocation14 + $0x30] sm:$0xf]
        %v2017 = vld [vmem:[#allocation14 + $0x34] sm:$0xf]
        %v2018 = vld [vmem:[#allocation14 + $0x38] sm:$0xf]
        %v2019 = vld [vmem:[#allocation14 + $0x3c] sm:$0xf]
        %v2020 = vld [vmem:[#allocation14 + $0x40] sm:$0xf]
        %v2021 = vld [vmem:[#allocation14 + $0x44] sm:$0xf]
        %v2022 = vld [vmem:[#allocation14 + $0x48] sm:$0xf]
        %v2023 = vld [vmem:[#allocation14 + $0x4c] sm:$0xf]
        %v2024 = vld [vmem:[#allocation14 + $0x50] sm:$0xf]
        %v2025 = vld [vmem:[#allocation14 + $0x54] sm:$0xf]
        %v2026 = vld [vmem:[#allocation14 + $0x58] sm:$0xf]
        %v2027 = vld [vmem:[#allocation14 + $0x5c] sm:$0xf]
        %v2028 = vld [vmem:[#allocation14 + $0x60] sm:$0xf]
        %v2029 = vld [vmem:[#allocation14 + $0x64] sm:$0xf]
        %v2030 = vld [vmem:[#allocation14 + $0x68] sm:$0xf]
        %v2031 = vld [vmem:[#allocation14 + $0x6c] sm:$0xf]
        %v2032 = vld [vmem:[#allocation14 + $0x70] sm:$0xf]
        %v2033 = vld [vmem:[#allocation14 + $0x74] sm:$0xf]
        %v2034 = vld [vmem:[#allocation14 + $0x78] sm:$0xf]
        %v2035 = vld [vmem:[#allocation14 + $0x7c] sm:$0xf]
        %v2036 = vld [vmem:[#allocation14 + $0x80] sm:$0xf]
        %v2037 = vld [vmem:[#allocation14 + $0x84] sm:$0xf]
        %v2038 = vld [vmem:[#allocation14 + $0x88] sm:$0xf]
        %v2039 = vld [vmem:[#allocation14 + $0x8c] sm:$0xf]
        %v2040 = vld [vmem:[#allocation14 + $0x90] sm:$0xf]
        %v2041 = vld [vmem:[#allocation14 + $0x94] sm:$0xf]
        %v2042 = vld [vmem:[#allocation14 + $0x98] sm:$0xf]
        %v2043 = vld [vmem:[#allocation14 + $0x9c] sm:$0xf]
        %v2044 = vld [vmem:[#allocation14 + $0xa0] sm:$0xf]
        %v2045 = vld [vmem:[#allocation14 + $0xa4] sm:$0xf]
        %v2046 = vld [vmem:[#allocation14 + $0xa8] sm:$0xf]
        %v2047 = vld [vmem:[#allocation14 + $0xac] sm:$0xf]
        %v2048 = vld [vmem:[#allocation14 + $0xb0] sm:$0xf]
        %v2049 = vld [vmem:[#allocation14 + $0xb4] sm:$0xf]
        %v2050 = vld [vmem:[#allocation14 + $0xb8] sm:$0xf]
        %v2051 = vld [vmem:[#allocation14 + $0xbc] sm:$0xf]
        %v2052 = vld [vmem:[#allocation14 + $0xc0] sm:$0xf]
        %v2053 = vld [vmem:[#allocation14 + $0xc4] sm:$0xf]
        %v2054 = vld [vmem:[#allocation14 + $0xc8] sm:$0xf]
        %v2055 = vld [vmem:[#allocation14 + $0xcc] sm:$0xf]
        %v2056 = vld [vmem:[#allocation14 + $0xd0] sm:$0xf]
        %v2057 = vld [vmem:[#allocation14 + $0xd4] sm:$0xf]
        %v2058 = vld [vmem:[#allocation14 + $0xd8] sm:$0xf]
        %v2059 = vld [vmem:[#allocation14 + $0xdc] sm:$0xf]
        %v2060 = vld [vmem:[#allocation14 + $0xe0] sm:$0xf]
        %v2061 = vld [vmem:[#allocation14 + $0xe4] sm:$0xf]
        %v2062 = vld [vmem:[#allocation14 + $0xe8] sm:$0xf]
        %v2063 = vld [vmem:[#allocation14 + $0xec] sm:$0xf]
        %v2064 = vld [vmem:[#allocation14 + $0xf0] sm:$0xf]
        %v2065 = vld [vmem:[#allocation14 + $0xf4] sm:$0xf]
        %v2066 = vld [vmem:[#allocation14 + $0xf8] sm:$0xf]
        %v2067 = vld [vmem:[#allocation14 + $0xfc] sm:$0xf]
        %v2068 = vld [vmem:[%s14] sm:$0x1]
        %v2070 = vlaneseq
        %v2071 = vshrl.u32 %v2070, 7
        %v2072 = vsub.s32 0, %v2071
        %v2073 = vrot.slane %v2068, %v2072
        %v2139 = vunpack.c.l.b16 %v2004
        %v2140 = vunpack.c.l.b16 %v2005
        %v2141 = vunpack.c.l.b16 %v2006
        %v2142 = vunpack.c.l.b16 %v2007
        %v2143 = vunpack.c.l.b16 %v2008
        %v2144 = vunpack.c.l.b16 %v2009
        %v2145 = vunpack.c.l.b16 %v2010
        %v2146 = vunpack.c.l.b16 %v2011
        %v2147 = vunpack.c.l.b16 %v2012
        %v2148 = vunpack.c.l.b16 %v2013
        %v2149 = vunpack.c.l.b16 %v2014
        %v2150 = vunpack.c.l.b16 %v2015
        %v2151 = vunpack.c.l.b16 %v2016
        %v2152 = vunpack.c.l.b16 %v2017
        %v2153 = vunpack.c.l.b16 %v2018
        %v2154 = vunpack.c.l.b16 %v2019
        %v2155 = vunpack.c.l.b16 %v2020
        %v2156 = vunpack.c.l.b16 %v2021
        %v2157 = vunpack.c.l.b16 %v2022
        %v2158 = vunpack.c.l.b16 %v2023
        %v2159 = vunpack.c.l.b16 %v2024
        %v2160 = vunpack.c.l.b16 %v2025
        %v2161 = vunpack.c.l.b16 %v2026
        %v2162 = vunpack.c.l.b16 %v2027
        %v2163 = vunpack.c.l.b16 %v2028
        %v2164 = vunpack.c.l.b16 %v2029
        %v2165 = vunpack.c.l.b16 %v2030
        %v2166 = vunpack.c.l.b16 %v2031
        %v2167 = vunpack.c.l.b16 %v2032
        %v2168 = vunpack.c.l.b16 %v2033
        %v2169 = vunpack.c.l.b16 %v2034
        %v2170 = vunpack.c.l.b16 %v2035
        %v2171 = vunpack.c.l.b16 %v2036
        %v2172 = vunpack.c.l.b16 %v2037
        %v2173 = vunpack.c.l.b16 %v2038
        %v2174 = vunpack.c.l.b16 %v2039
        %v2175 = vunpack.c.l.b16 %v2040
        %v2176 = vunpack.c.l.b16 %v2041
        %v2177 = vunpack.c.l.b16 %v2042
        %v2178 = vunpack.c.l.b16 %v2043
        %v2179 = vunpack.c.l.b16 %v2044
        %v2180 = vunpack.c.l.b16 %v2045
        %v2181 = vunpack.c.l.b16 %v2046
        %v2182 = vunpack.c.l.b16 %v2047
        %v2183 = vunpack.c.l.b16 %v2048
        %v2184 = vunpack.c.l.b16 %v2049
        %v2185 = vunpack.c.l.b16 %v2050
        %v2186 = vunpack.c.l.b16 %v2051
        %v2187 = vunpack.c.l.b16 %v2052
        %v2188 = vunpack.c.l.b16 %v2053
        %v2189 = vunpack.c.l.b16 %v2054
        %v2190 = vunpack.c.l.b16 %v2055
        %v2191 = vunpack.c.l.b16 %v2056
        %v2192 = vunpack.c.l.b16 %v2057
        %v2193 = vunpack.c.l.b16 %v2058
        %v2194 = vunpack.c.l.b16 %v2059
        %v2195 = vunpack.c.l.b16 %v2060
        %v2196 = vunpack.c.l.b16 %v2061
        %v2197 = vunpack.c.l.b16 %v2062
        %v2198 = vunpack.c.l.b16 %v2063
        %v2199 = vunpack.c.l.b16 %v2064
        %v2200 = vunpack.c.l.b16 %v2065
        %v2201 = vunpack.c.l.b16 %v2066
        %v2202 = vunpack.c.l.b16 %v2067
        %v2203 = vpack.c.b16 %v2140, %v2139
        %v2204 = vpack.c.b16 %v2142, %v2141
        %v2205 = vpack.c.b16 %v2144, %v2143
        %v2206 = vpack.c.b16 %v2146, %v2145
        %v2207 = vpack.c.b16 %v2148, %v2147
        %v2208 = vpack.c.b16 %v2150, %v2149
        %v2209 = vpack.c.b16 %v2152, %v2151
        %v2210 = vpack.c.b16 %v2154, %v2153
        %v2211 = vpack.c.b16 %v2156, %v2155
        %v2212 = vpack.c.b16 %v2158, %v2157
        %v2213 = vpack.c.b16 %v2160, %v2159
        %v2214 = vpack.c.b16 %v2162, %v2161
        %v2215 = vpack.c.b16 %v2164, %v2163
        %v2216 = vpack.c.b16 %v2166, %v2165
        %v2217 = vpack.c.b16 %v2168, %v2167
        %v2218 = vpack.c.b16 %v2170, %v2169
        %v2219 = vpack.c.b16 %v2172, %v2171
        %v2220 = vpack.c.b16 %v2174, %v2173
        %v2221 = vpack.c.b16 %v2176, %v2175
        %v2222 = vpack.c.b16 %v2178, %v2177
        %v2223 = vpack.c.b16 %v2180, %v2179
        %v2224 = vpack.c.b16 %v2182, %v2181
        %v2225 = vpack.c.b16 %v2184, %v2183
        %v2226 = vpack.c.b16 %v2186, %v2185
        %v2227 = vpack.c.b16 %v2188, %v2187
        %v2228 = vpack.c.b16 %v2190, %v2189
        %v2229 = vpack.c.b16 %v2192, %v2191
        %v2230 = vpack.c.b16 %v2194, %v2193
        %v2231 = vpack.c.b16 %v2196, %v2195
        %v2232 = vpack.c.b16 %v2198, %v2197
        %v2233 = vpack.c.b16 %v2200, %v2199
        %v2234 = vpack.c.b16 %v2202, %v2201
        %2267 = vmatprep.subr.bf16.mxu0 0
        %2268 = vmatpush1.bf16.msra.mxu0 %v2203
        %2269 = vmatprep.subr.bf16.mxu0 0
        %2270 = vmatpush1.bf16.msra.mxu0 %v2204
        %2271 = vmatprep.subr.bf16.mxu0 0
        %2272 = vmatpush1.bf16.msra.mxu0 %v2205
        %2273 = vmatprep.subr.bf16.mxu0 0
        %2274 = vmatpush1.bf16.msra.mxu0 %v2206
        %2275 = vmatprep.subr.bf16.mxu0 0
        %2276 = vmatpush1.bf16.msra.mxu0 %v2207
        %2277 = vmatprep.subr.bf16.mxu0 0
        %2278 = vmatpush1.bf16.msra.mxu0 %v2208
        %2279 = vmatprep.subr.bf16.mxu0 0
        %2280 = vmatpush1.bf16.msra.mxu0 %v2209
        %2281 = vmatprep.subr.bf16.mxu0 0
        %2282 = vmatpush1.bf16.msra.mxu0 %v2210
        %2283 = vmatprep.subr.bf16.mxu0 0
        %2284 = vmatpush1.bf16.msra.mxu0 %v2211
        %2285 = vmatprep.subr.bf16.mxu0 0
        %2286 = vmatpush1.bf16.msra.mxu0 %v2212
        %2287 = vmatprep.subr.bf16.mxu0 0
        %2288 = vmatpush1.bf16.msra.mxu0 %v2213
        %2289 = vmatprep.subr.bf16.mxu0 0
        %2290 = vmatpush1.bf16.msra.mxu0 %v2214
        %2291 = vmatprep.subr.bf16.mxu0 0
        %2292 = vmatpush1.bf16.msra.mxu0 %v2215
        %2293 = vmatprep.subr.bf16.mxu0 0
        %2294 = vmatpush1.bf16.msra.mxu0 %v2216
        %2295 = vmatprep.subr.bf16.mxu0 0
        %2296 = vmatpush1.bf16.msra.mxu0 %v2217
        %2297 = vmatprep.subr.bf16.mxu0 0
        %2298 = vmatpush1.bf16.msra.mxu0 %v2218
        %2299 = vmatprep.mubr.bf16.mxu0 %v2001
        %2300 = vmatmul.mubr.bf16.gmra.mrb[0].mxu0 %v2000
        %v2301 = vpop.f32.mrb[0].mxu0
        %v2302 = vadd.f32 %v2073, %v2301
        %v2303 = vpop.f32.mrb[0].mxu0
        %v2304 = vpop.f32.mrb[0].mxu0
        %v2305 = vpop.f32.mrb[0].mxu0
        %2306 = vdwg.mxu0
        %2307 = vmatprep.subr.bf16.mxu0 0
        %2308 = vmatpush1.bf16.msra.mxu0 %v2219
        %2309 = vmatprep.subr.bf16.mxu0 0
        %2310 = vmatpush1.bf16.msra.mxu0 %v2220
        %2311 = vmatprep.subr.bf16.mxu0 0
        %2312 = vmatpush1.bf16.msra.mxu0 %v2221
        %2313 = vmatprep.subr.bf16.mxu0 0
        %2314 = vmatpush1.bf16.msra.mxu0 %v2222
        %2315 = vmatprep.subr.bf16.mxu0 0
        %2316 = vmatpush1.bf16.msra.mxu0 %v2223
        %2317 = vmatprep.subr.bf16.mxu0 0
        %2318 = vmatpush1.bf16.msra.mxu0 %v2224
        %2319 = vmatprep.subr.bf16.mxu0 0
        %2320 = vmatpush1.bf16.msra.mxu0 %v2225
        %2321 = vmatprep.subr.bf16.mxu0 0
        %2322 = vmatpush1.bf16.msra.mxu0 %v2226
        %2323 = vmatprep.subr.bf16.mxu0 0
        %2324 = vmatpush1.bf16.msra.mxu0 %v2227
        %2325 = vmatprep.subr.bf16.mxu0 0
        %2326 = vmatpush1.bf16.msra.mxu0 %v2228
        %2327 = vmatprep.subr.bf16.mxu0 0
        %2328 = vmatpush1.bf16.msra.mxu0 %v2229
        %2329 = vmatprep.subr.bf16.mxu0 0
        %2330 = vmatpush1.bf16.msra.mxu0 %v2230
        %2331 = vmatprep.subr.bf16.mxu0 0
        %2332 = vmatpush1.bf16.msra.mxu0 %v2231
        %2333 = vmatprep.subr.bf16.mxu0 0
        %2334 = vmatpush1.bf16.msra.mxu0 %v2232
        %2335 = vmatprep.subr.bf16.mxu0 0
        %2336 = vmatpush1.bf16.msra.mxu0 %v2233
        %2337 = vmatprep.subr.bf16.mxu0 0
        %2338 = vmatpush1.bf16.msra.mxu0 %v2234
        %2339 = vmatprep.mubr.bf16.mxu0 %v2003
        %2340 = vmatmul.mubr.bf16.gmra.mrb[0].mxu0 %v2002
        %v2341 = vpop.f32.mrb[0].mxu0
        %v2342 = vadd.f32 %v2302, %v2341
        %v2343 = vpop.f32.mrb[0].mxu0
        %v2344 = vpop.f32.mrb[0].mxu0
        %v2345 = vpop.f32.mrb[0].mxu0
        %2346 = vdwg.mxu0
        %v2347 = vadd.f32 %v1671, %v2342
        %2348 = vst [vmem:[%s598] sm:$0xff] %v2347
        %s2349 = sand.u32 %s377, 1
        %s2350 = scalar_lea.sflag [#allocation7], %s2349
        %s2351 = sand.u32 %s377, 1
        %s2352 = smul.addr %s2351, 8
        %s2353 = scalar_lea.vmem [#allocation16], %s2352
        // Predicated region
        $region109: #{tpu_custom_call.1} parent=79 // pred_check
          %p2354 = pneg %p387
        $region110: #{tpu_custom_call.1} parent=79 // pred_check_branch
          %2356 = sbr.rel (%p2354) target = $region112
        $region111: #{tpu_custom_call.1} parent=79 // pred_region
          %s2358 = ssub.s32 128, 128
          %2359 = vsyncadd %s2350, %s2358
          %s2360 = smul.addr %s40, 2
          %s2361 = sadd.s32 %s39, %s2360
          %s2362 = smul.addr %s2361, 128
          %s2363 = scalar_lea.hbm %s15, %s2362
          %s2365 = sshll.u32 %s2353, 4
          %s2366 = int_to_ptr.vmem [resolvable:$true] %s2365
          %2368 = dma.vmem_to_hbm [thread:$0]  %s2366, 128, %s2363, %s2350
        $region112: #{tpu_custom_call.1} parent=79 // pred_fallthru
          _
      $region80: #{tpu_custom_call.1} parent=5 // pred_fallthru
        _
      %p2369 = scmp.le.s32.totalorder 2, %s30
      // Predicated region
      $region113: #{tpu_custom_call.1} parent=5 // pred_check
        %p2370 = pneg %p2369
      $region114: #{tpu_custom_call.1} parent=5 // pred_check_branch
        %2372 = sbr.rel (%p2370) target = $region116
      $region115: #{tpu_custom_call.1} parent=5 // pred_region
        %s2373 = ssub.s32 %s30, 2
        // Predicated region
        $region117: #{tpu_custom_call.1} parent=115 // pred_check
          %p2374 = pneg %p393
        $region118: #{tpu_custom_call.1} parent=115 // pred_check_branch
          %2376 = sbr.rel (%p2374) target = $region120
        $region119: #{tpu_custom_call.1} parent=115 // pred_region
          %s2377 = sand.u32 %s378, 1
          %s2378 = scalar_lea.sflag [#allocation7], %s2377
          %s2379 = sand.u32 %s378, 1
          %s2380 = smul.addr %s2379, 8
          %s2381 = scalar_lea.vmem [#allocation16], %s2380
          %2382 = dma.done %s2378, 128
        $region120: #{tpu_custom_call.1} parent=115 // pred_fallthru
          _
      $region116: #{tpu_custom_call.1} parent=5 // pred_fallthru
        _
    $region6: #{tpu_custom_call.1} parent=1 // loop_footer
      %s34 = sadd.s32 1, %s30
    $region7: #{tpu_custom_call.1} parent=1 // loop_footer_branch
      %29 = sbr.rel target = $region3
    $region8: #{tpu_custom_call.1} parent=1 // loop_exit
      _
    %2383 = vsyncpa [#allocation6], 1
    %s2384 = scalar_lea.sflag [#allocation6], 1
    %2385 = vsyncpa %s2384, 1
    %2386 = vsyncpa [#allocation9], 1
    %2387 = vsyncpa [#allocation12], 1
    %2388 = vsyncpa [#allocation15], 1
    %2389 = vsyncpa [#allocation7], 1
    %s2390 = scalar_lea.sflag [#allocation7], 1
    %2391 = vsyncpa %s2390, 1

</llo_original>
